<compile_context>
chip_gen: v7x
topology: tpu7x:2x2x1
jax: 0.10.0
libtpu: 0.0.40
codegen_flags: <defaults>
</compile_context>

<pallas_src>
import functools

import jax
import jax.numpy as jnp
from jax.experimental import pallas as pl
from jax.experimental.pallas import tpu as pltpu

EPSILON = 1.0  # matches `epsilon = 1` in the reference


# --------------------------------------------------------------------------- Pallas kernel

def _gated_matmul_kernel(a_ref, w1_ref, w2_ref, b1_ref, b2_ref, o_ref):
    # Full-K / full-N blocks: one dot per gate per M-tile, f32 accumulation on the MXU,
    # bias add + gating product written straight into the output block (no scratch).
    a = a_ref[...]
    z1 = jnp.dot(a, w1_ref[...], preferred_element_type=jnp.float32) + b1_ref[...]
    z2 = jnp.dot(a, w2_ref[...], preferred_element_type=jnp.float32) + b2_ref[...]
    o_ref[...] = z1 * z2


def pallas_gated_matmul(a, w1, b1, w2, b2, *, compute_dtype=jnp.bfloat16, tm_cap=256):
    """(a @ w1 + b1) * (a @ w2 + b2) fused on the MXU.

    a: (M, K) activations, w1/w2: (K, N) weights, b1/b2: (N,) biases -> (M, N) f32.

    * M is tiled; the grid axis is "parallel" so Mosaic can shard it across cores.
      The ragged edge tile is handled by Pallas masking -> no host-side padding of A.
    * K and N are small in SCNN (K = L*13*C, N = C) so they stay full/untiled block
      dims (legal since a block dim may equal the full array dim) -> no K-accumulator
      scratch and no zero-padded weight copies in HBM.
    * Operands are cast to bf16 at the boundary (half the DMA bytes, full-rate MXU);
      accumulation and output stay f32.
    """
    M, K = a.shape
    K2, N = w1.shape
    assert K == K2 and w2.shape == (K, N)

    a = a.astype(compute_dtype)
    w1 = w1.astype(compute_dtype)
    w2 = w2.astype(compute_dtype)
    b1 = b1.reshape(1, N).astype(jnp.float32)
    b2 = b2.reshape(1, N).astype(jnp.float32)

    # M tile: 256 rows keeps double-buffered A tiles + both weight slabs + f32 output
    # well under a 32 MiB scoped-VMEM budget even at production K (~13*C*L), which is
    # safe on v5e (16 MiB default scoped), v6e and v7x (64 MiB physical). tm_cap is a
    # multiple of 8; a single full-M block is also legal when M <= tm_cap.
    tm = M if M <= tm_cap else tm_cap

    out = pl.pallas_call(
        _gated_matmul_kernel,
        out_shape=jax.ShapeDtypeStruct((M, N), jnp.float32),
        grid_spec=pltpu.PrefetchScalarGridSpec(
            num_scalar_prefetch=0,
            grid=(pl.cdiv(M, tm),),
            in_specs=[
                pl.BlockSpec((tm, K), lambda i: (i, 0)),
                pl.BlockSpec((K, N), lambda i: (0, 0)),
                pl.BlockSpec((K, N), lambda i: (0, 0)),
                pl.BlockSpec((1, N), lambda i: (0, 0)),
                pl.BlockSpec((1, N), lambda i: (0, 0)),
            ],
            out_specs=pl.BlockSpec((tm, N), lambda i: (i, 0)),
        ),
        compiler_params=pltpu.CompilerParams(
            dimension_semantics=("parallel",),
            vmem_limit_bytes=32 * 1024 * 1024,
        ),
    )(a, w1, w2, b1, b2)
    return out


# --------------------------------------------------------------------------- norm / extrapolate glue (channel-last, plain JAX)

def constant_extrapolate(x, p):
    # x: (B, N, T, C) -> replicate-pad p steps at the end of time.
    return jnp.concatenate([x, jnp.repeat(x[:, :, -1:, :], p, axis=2)], axis=2)


def seasonal_extrapolate(x, p):
    # circular pad p steps at the end of time.
    return jnp.concatenate([x, x[:, :, :p, :]], axis=2)


def term_norm(x, L):
    B, N, T, C = x.shape
    wins = jnp.stack([x[:, :, L - 1 - i: T - i, :] for i in range(L)], axis=-1)  # (B,N,T-L+1,C,L)
    mean = wins.mean(axis=-1)
    var = (wins ** 2).mean(axis=-1) - mean ** 2 + 1e-05
    mean = jnp.concatenate([jnp.repeat(mean[:, :, :1, :], L - 1, axis=2), mean], axis=2)
    var = jnp.concatenate([jnp.repeat(var[:, :, :1, :], L - 1, axis=2), var], axis=2)
    out = (x - mean) / jnp.sqrt(var + EPSILON)
    return out, mean, jnp.sqrt(var)


def seasonal_norm(x, period):
    B, N, T, C = x.shape
    assert T % period == 0, "SeasonalNorm requires T divisible by period_length"
    xp = x.reshape(B, N, T // period, period, C)
    mean = xp.mean(axis=2)                                   # (B, N, period, C)
    var = (xp ** 2).mean(axis=2) - mean ** 2 + 1e-05
    mean = jnp.tile(mean, (1, 1, T // period, 1))
    var = jnp.tile(var, (1, 1, T // period, 1))
    out = (x - mean) / jnp.sqrt(var + EPSILON)
    return out, mean, jnp.sqrt(var)


def ada_spatial_norm(x, node_emb):
    B, N, T, C = x.shape
    logits = node_emb @ node_emb.T - 10.0 * jnp.eye(N, dtype=jnp.float32)
    adj = jax.nn.softmax(logits, axis=-1)
    # one small einsum computes both E[x] and E[x^2] over neighbours
    stats = jnp.einsum('ij,bjtc->bitc', adj, jnp.concatenate([x, x * x], axis=-1))
    mean, sq = stats[..., :C], stats[..., C:]
    var = sq - mean ** 2 + 1e-05
    out = (x - mean) / jnp.sqrt(var + EPSILON)
    return out, mean, jnp.sqrt(var)


def batched_residual_extrapolate(x_stages, ws, bs, num_pred):
    """All four ResidualExtrapolate projections of a layer as ONE batched einsum.

    x_stages: list of 4 tensors (B, N, T, C); ws[g]: (C*P, C, 5) torch layout; bs[g]: (C*P,).
    Output channel k of the torch Conv2d maps to (pred p = k // C, channel c = k % C).
    """
    B, N, T, C = x_stages[0].shape
    tails = jnp.stack([xi[:, :, -5:, :].reshape(B * N, 5 * C) for xi in x_stages], axis=0)
    wm = jnp.stack([w.transpose(2, 1, 0).reshape(5 * C, C * num_pred) for w in ws], axis=0)
    y = jnp.einsum('gmk,gkn->gmn', tails, wm) + jnp.stack(bs)[:, None, :]
    projs = y.reshape(len(x_stages), B, N, num_pred, C)
    return [jnp.concatenate([x_stages[g], projs[g]], axis=2) for g in range(len(x_stages))]


# --------------------------------------------------------------------------- SCLayer

def sc_layer_forward(x, lp, cfg):
    B, N, T, C = x.shape
    P = cfg["num_pred"]
    L = lp["conv1_w"].shape[-1]            # num_local_input
    assert L - 1 <= T

    x0_proj = constant_extrapolate(x, P)

    x1, ltm, lts = term_norm(x, cfg["long_term"])
    x2, sm, ss = seasonal_norm(x1, cfg["period_length"])
    x3, stm, sts = term_norm(x2, cfg["short_term"])
    x4, spm, sps = ada_spatial_norm(x3, lp["node_emb"])

    projs = batched_residual_extrapolate(
        [x1, x2, x3, x4],
        [lp["re1_w"], lp["re2_w"], lp["re3_w"], lp["re4_w"]],
        [lp["re1_b"], lp["re2_b"], lp["re3_b"], lp["re4_b"]],
        P)

    ltm_p, lts_p = constant_extrapolate(ltm, P), constant_extrapolate(lts, P)
    sm_p, ss_p = seasonal_extrapolate(sm, P), seasonal_extrapolate(ss, P)
    stm_p, sts_p = constant_extrapolate(stm, P), constant_extrapolate(sts, P)
    spm_p, sps_p = constant_extrapolate(spm, P), constant_extrapolate(sps, P)

    zeros = jnp.zeros_like(x0_proj)
    xs_blocks = [x0_proj, projs[0], ltm_p, lts_p, projs[1], sm_p, ss_p,
                 projs[2], stm_p, sts_p, projs[3], spm_p, sps_p]     # 13 blocks of C channels
    aux_blocks = [zeros, zeros, ltm_p, lts_p, zeros, sm_p, ss_p,
                  zeros, stm_p, sts_p, zeros, spm_p, sps_p]

    X = jnp.concatenate(xs_blocks, axis=-1)                           # (B, N, T+P, 13C)
    X = jnp.pad(X, ((0, 0), (0, 0), (1, 0), (0, 0)))                  # constant front pad on time
    T_tot = T + P + 1
    T_out = T_tot - L + 1
    K = L * 13 * C

    # Taps folded into K along the lane (channel) axis: a concat of L shifted time
    # slices in channel-last layout -> no transposes, no zero padding.
    a_x = jnp.concatenate([X[:, :, k:k + T_out, :] for k in range(L)], axis=-1)
    a_x = a_x.reshape(B * N * T_out, K)

    # Aux path: only its last P outputs are ever used -> build just the (P+L-1)-step
    # tail of X_aux (never the full tensor; the front pad never reaches this window).
    tail_len = P + L - 1
    x_aux_tail = jnp.concatenate([blk[:, :, -tail_len:, :] for blk in aux_blocks], axis=-1)
    a_aux = jnp.concatenate([x_aux_tail[:, :, k:k + P, :] for k in range(L)], axis=-1)
    a_aux = a_aux.reshape(B * N * P, K)

    # torch Conv2d weight (C, 13C, L): column order of A is (tap, cin) -> W[tap*13C+cin, cout]
    w1 = lp["conv1_w"].transpose(2, 1, 0).reshape(K, C)
    w2 = lp["conv2_w"].transpose(2, 1, 0).reshape(K, C)

    # main + aux slabs share weights -> one fused Pallas call.
    z = pallas_gated_matmul(jnp.concatenate([a_x, a_aux], axis=0),
                            w1, lp["conv1_b"], w2, lp["conv2_b"])
    gated = z[:B * N * T_out].reshape(B, N, T_out, C)
    pred_aux_z = z[B * N * T_out:].reshape(B, N, P, C)

    x_z = gated[:, :, :-P, :]
    pred_z = gated[:, :, -P:, :]

    # tiny 1x1 convs stay in XLA; skip conv applied to main+aux slices in one einsum.
    both = jnp.stack([pred_z, pred_aux_z], axis=0)
    sboth = jnp.einsum('xbnpc,oc->xbnpo', both, lp["skip_w"]) + lp["skip_b"]
    s, s_aux = sboth[0], sboth[1]
    x_z = jnp.einsum('bntc,oc->bnto', x_z, lp["res_w"]) + lp["res_b"]
    return x_z, s_aux, s


# --------------------------------------------------------------------------- SCNN

def scnn_forward(params, inp, cfg):
    """inp: (B, T, N, in_dim) -> pred_mean (B, num_pred, N, 1)  (eval-mode output)."""
    P = cfg["num_pred"]
    x = jnp.transpose(inp, (0, 2, 1, 3)).astype(jnp.float32)          # (B, N, T, in_dim)
    x = jnp.einsum('bnti,ci->bntc', x, params["start_w"]) + params["start_b"]
    B, N, T, C = x.shape

    out = jnp.zeros((B, N, P, C), jnp.float32)
    out_aux = jnp.zeros((B, N, P, C), jnp.float32)
    for i in range(cfg["layers"]):
        x, s_aux, s = sc_layer_forward(x, params["layers"][i], cfg)
        out = out + s
        out_aux = out_aux + s_aux

    # grouped end_conv (groups = P, kernel 1) as per-group (C x C) einsum — no block-diag zeros.
    w_g = params["end_w"][:, :, 0].reshape(P, C, C)                   # [p, c_out, c_in]
    b_g = params["end_b"].reshape(P, C)
    feats = jnp.einsum('bnpi,poi->bnpo', out, w_g) + b_g              # (B, N, P, C)
    feats = feats.reshape(B * N, P, C)

    # StudentT arg projection (df, loc, scale); eval mode only needs loc.
    y = feats @ params["args_w"] + params["args_b"]                   # (B*N, P, 3)
    _df = 2.0 + jax.nn.softplus(y[..., 0])
    loc = y[..., 1]
    _scale = jnp.maximum(jax.nn.softplus(y[..., 2]), 0.2)             # F.threshold(scale, 0.2, 0.2)
    # TODO(synk): torch StudentT distribution objects (training branch) have no Pallas
    # equivalent; only the eval-path pred_mean (= loc) is produced.
    pred_mean = jnp.transpose(loc.reshape(B, N, P, 1), (0, 2, 1, 3))  # (B, P, N, 1)
    return pred_mean


# --------------------------------------------------------------------------- params

def _init(key, shape, scale=0.1):
    return scale * jax.random.normal(key, shape, dtype=jnp.float32)


def init_params(key, cfg):
    c, P, L, n, in_dim = (cfg["channels"], cfg["num_pred"], cfg["num_local_input"],
                          cfg["n"], cfg["in_dim"])
    keys = iter(jax.random.split(key, 64))
    params = {
        "start_w": _init(next(keys), (c, in_dim)),
        "start_b": _init(next(keys), (c,)),
        "end_w": _init(next(keys), (P * c, c, 1)),
        "end_b": _init(next(keys), (P * c,)),
        "args_w": _init(next(keys), (c, 3)),      # [df, loc, scale] heads
        "args_b": _init(next(keys), (3,)),
        "layers": [],
    }
    for _ in range(cfg["layers"]):
        lp = {
            "node_emb": _init(next(keys), (n, c)),
            "conv1_w": _init(next(keys), (c, 13 * c, L)),
            "conv1_b": _init(next(keys), (c,)),
            "conv2_w": _init(next(keys), (c, 13 * c, L)),
            "conv2_b": _init(next(keys), (c,)),
            "skip_w": _init(next(keys), (c, c)),
            "skip_b": _init(next(keys), (c,)),
            "res_w": _init(next(keys), (c, c)),
            "res_b": _init(next(keys), (c,)),
        }
        for j in range(1, 5):
            lp[f"re{j}_w"] = _init(next(keys), (c * P, c, 5))
            lp[f"re{j}_b"] = _init(next(keys), (c * P,))
        params["layers"].append(lp)
    return params


# --------------------------------------------------------------------------- main

if __name__ == "__main__":
    cfg = dict(
        b=2, t=16, n=8, in_dim=1,
        channels=8, num_local_input=2, num_pred=4,
        period_length=4, short_term=3, long_term=6, layers=2,
    )
    key = jax.random.PRNGKey(0)
    pkey, xkey = jax.random.split(key)
    params = init_params(pkey, cfg)
    x = jax.random.normal(xkey, (cfg["b"], cfg["t"], cfg["n"], cfg["in_dim"]), dtype=jnp.float32)

    fwd = jax.jit(functools.partial(scnn_forward, cfg=cfg))
    pred_mean = jax.block_until_ready(fwd(params, x))

    assert pred_mean.shape == (cfg["b"], cfg["num_pred"], cfg["n"], 1), pred_mean.shape
    assert bool(jnp.all(jnp.isfinite(pred_mean)))
    print("KERNEL_OK")
</pallas_src>

<mosaic_0001>
module attributes {stable_mosaic.version = 11 : i64} {
  func.func @_gated_matmul_kernel(%arg0: i32, %arg1: memref<256x208xbf16, #tpu.memory_space<vmem>>, %arg2: memref<208x8xbf16, #tpu.memory_space<vmem>>, %arg3: memref<208x8xbf16, #tpu.memory_space<vmem>>, %arg4: memref<1x8xf32, #tpu.memory_space<vmem>>, %arg5: memref<1x8xf32, #tpu.memory_space<vmem>>, %arg6: memref<256x8xf32, #tpu.memory_space<vmem>>) attributes {dimension_semantics = [#tpu.dimension_semantics<parallel>], iteration_bounds = array<i64: 2>, scalar_prefetch = 0 : i64, scratch_operands = 0 : i64, tpu.core_type = #tpu.core_type<tc>, window_params = [{transform_indices = @transform_0, window_bounds = array<i64: 256, 208>}, {pipeline_mode = #tpu.pipeline_mode<synchronous>, transform_indices = @transform_1, window_bounds = array<i64: 208, 8>}, {pipeline_mode = #tpu.pipeline_mode<synchronous>, transform_indices = @transform_2, window_bounds = array<i64: 208, 8>}, {pipeline_mode = #tpu.pipeline_mode<synchronous>, transform_indices = @transform_3, window_bounds = array<i64: 1, 8>}, {pipeline_mode = #tpu.pipeline_mode<synchronous>, transform_indices = @transform_4, window_bounds = array<i64: 1, 8>}, {transform_indices = @transform_5, window_bounds = array<i64: 256, 8>}]} {
    %c0 = arith.constant 0 : index
    %c0_0 = arith.constant 0 : index
    %0 = vector.load %arg1[%c0, %c0_0] : memref<256x208xbf16, #tpu.memory_space<vmem>>, vector<256x208xbf16>
    %c0_1 = arith.constant 0 : index
    %c0_2 = arith.constant 0 : index
    %1 = vector.load %arg2[%c0_1, %c0_2] : memref<208x8xbf16, #tpu.memory_space<vmem>>, vector<208x8xbf16>
    %cst = arith.constant dense<0.000000e+00> : vector<256x8xf32>
    %2 = tpu.matmul %0, %1, %cst {dimension_numbers = #tpu.dot_dimension_numbers<[1], [0], [0], [1], [0, 0, 1, 1], [], []>} : vector<256x208xbf16>, vector<208x8xbf16>, vector<256x8xf32> -> vector<256x8xf32>
    %c0_3 = arith.constant 0 : index
    %c0_4 = arith.constant 0 : index
    %3 = vector.load %arg4[%c0_3, %c0_4] : memref<1x8xf32, #tpu.memory_space<vmem>>, vector<1x8xf32>
    %4 = vector.broadcast %3 : vector<1x8xf32> to vector<256x8xf32>
    %5 = arith.addf %2, %4 : vector<256x8xf32>
    %c0_5 = arith.constant 0 : index
    %c0_6 = arith.constant 0 : index
    %6 = vector.load %arg3[%c0_5, %c0_6] : memref<208x8xbf16, #tpu.memory_space<vmem>>, vector<208x8xbf16>
    %cst_7 = arith.constant dense<0.000000e+00> : vector<256x8xf32>
    %7 = tpu.matmul %0, %6, %cst_7 {dimension_numbers = #tpu.dot_dimension_numbers<[1], [0], [0], [1], [0, 0, 1, 1], [], []>} : vector<256x208xbf16>, vector<208x8xbf16>, vector<256x8xf32> -> vector<256x8xf32>
    %c0_8 = arith.constant 0 : index
    %c0_9 = arith.constant 0 : index
    %8 = vector.load %arg5[%c0_8, %c0_9] : memref<1x8xf32, #tpu.memory_space<vmem>>, vector<1x8xf32>
    %9 = vector.broadcast %8 : vector<1x8xf32> to vector<256x8xf32>
    %10 = arith.addf %7, %9 : vector<256x8xf32>
    %11 = arith.mulf %5, %10 : vector<256x8xf32>
    %c0_10 = arith.constant 0 : index
    %c0_11 = arith.constant 0 : index
    %12 = vector.load %arg6[%c0_10, %c0_11] : memref<256x8xf32, #tpu.memory_space<vmem>>, vector<256x8xf32>
    tpu.vector_store %arg6[%c0_10, %c0_11], %11 {strides = array<i32>} : memref<256x8xf32, #tpu.memory_space<vmem>>, vector<256x8xf32>,
    return
  }
  func.func @transform_0(%arg0: i32) -> (i32, i32) {
    %c0_i32 = arith.constant 0 : i32
    %c0_i32_0 = arith.constant 0 : i32
    return %arg0, %c0_i32 : i32, i32
  }
  func.func @transform_1(%arg0: i32) -> (i32, i32) {
    %c0_i32 = arith.constant 0 : i32
    %c0_i32_0 = arith.constant 0 : i32
    %c0_i32_1 = arith.constant 0 : i32
    return %c0_i32, %c0_i32_0 : i32, i32
  }
  func.func @transform_2(%arg0: i32) -> (i32, i32) {
    %c0_i32 = arith.constant 0 : i32
    %c0_i32_0 = arith.constant 0 : i32
    %c0_i32_1 = arith.constant 0 : i32
    return %c0_i32, %c0_i32_0 : i32, i32
  }
  func.func @transform_3(%arg0: i32) -> (i32, i32) {
    %c0_i32 = arith.constant 0 : i32
    %c0_i32_0 = arith.constant 0 : i32
    %c0_i32_1 = arith.constant 0 : i32
    return %c0_i32, %c0_i32_0 : i32, i32
  }
  func.func @transform_4(%arg0: i32) -> (i32, i32) {
    %c0_i32 = arith.constant 0 : i32
    %c0_i32_0 = arith.constant 0 : i32
    %c0_i32_1 = arith.constant 0 : i32
    return %c0_i32, %c0_i32_0 : i32, i32
  }
  func.func @transform_5(%arg0: i32) -> (i32, i32) {
    %c0_i32 = arith.constant 0 : i32
    %c0_i32_0 = arith.constant 0 : i32
    return %arg0, %c0_i32 : i32, i32
  }
}

</mosaic_0001>

<llo_original>
// kernel: squeeze.12
$region0: #{squeeze.12}
  %s0 = inlined_call_operand.vmem [shape: bf16[1,16,32], index: 0, kind: input, shape index: {}]
  %s1 = inlined_call_operand.vmem [shape: bf16[2,8,4,8], index: 1, kind: output, shape index: {}]
  $region1: #{squeeze.12} parent=0
    #allocation0 [shape = 'u8[65536]{0}', space=vmem, size = 0x10000, scoped, tag = 'scoped mem for output reshape']
    #allocation1 [shape = 'u8[8192]{0}', space=vmem, size = 0x2000, scoped, tag = 'scoped mem for input reshape']
    %s3 = smul.u32 4, 2
    %s4 = sshllo.u32 0, %s3
    %s5 = scalar_lea.vmem %s0, 4
    %s6 = sshrl.u32 %s4, 1
    %s7 = sor.u32 %s4, %s6
    %s8 = sand.u32 %s7, 85
    %s9 = sshrl.u32 %s8, 1
    %s10 = sor.u32 %s8, %s9
    %s11 = sand.u32 51, %s10
    %s12 = sshrl.u32 %s11, 2
    %s13 = sor.u32 %s11, %s12
    %s14 = sand.u32 15, %s13
    %v15 = vld [vmem:[%s5] sm:%s14]
    %v16 = vunpack.c.l.bf16 %v15
    %v17 = vunpack.c.h.bf16 %v15
    %s18 = scalar_lea.vmem [#allocation1], 8
    %19 = vst [vmem:[%s18] sm:%s4] %v16
    %s20 = sshrl.u32 %s4, 1
    %s21 = sor.u32 %s4, %s20
    %s22 = sand.u32 %s21, 85
    %s23 = sshrl.u32 %s22, 1
    %s24 = sor.u32 %s22, %s23
    %s25 = sand.u32 51, %s24
    %s26 = sshrl.u32 %s25, 2
    %s27 = sor.u32 %s25, %s26
    %s28 = sand.u32 15, %s27
    %v29 = vld [vmem:[%s0] sm:%s28]
    %v30 = vunpack.c.l.bf16 %v29
    %v31 = vunpack.c.h.bf16 %v29
    %32 = vst [vmem:[#allocation1] sm:%s4] %v30
    %v33 = vld [vmem:[#allocation1] sm:$0xff]
    %vm34 = vcmask 64512
    %35 = vst.msk [vmem:[#allocation0] ss:$8 sm:$0xf] %vm34, %v33
    %36 = vst.msk [vmem:[#allocation0] ss:$8 sm:$0xf0] %vm34, %v33
    %s37 = scalar_lea.vmem [#allocation1], 8
    %v38 = vld [vmem:[%s37] sm:$0xff]
    %vm39 = vcmask 64512
    %s40 = scalar_lea.vmem [#allocation0], 64
    %41 = vst.msk [vmem:[%s40] ss:$8 sm:$0xf] %vm39, %v38
    %s42 = scalar_lea.vmem [#allocation0], 64
    %43 = vst.msk [vmem:[%s42] ss:$8 sm:$0xf0] %vm39, %v38
    %v44 = vld [vmem:[#allocation1] sm:$0xff]
    %45 = vrot.lane.b32.xlu0 %v44, 120
    %v46 = vpop.permute.xlu0 %45
    %vm47 = vcmask 64512
    %s48 = scalar_lea.vmem [#allocation0], 1
    %49 = vst.msk [vmem:[%s48] ss:$8 sm:$0xf] %vm47, %v46
    %s50 = scalar_lea.vmem [#allocation0], 1
    %51 = vst.msk [vmem:[%s50] ss:$8 sm:$0xf0] %vm47, %v46
    %s52 = scalar_lea.vmem [#allocation1], 8
    %v53 = vld [vmem:[%s52] sm:$0xff]
    %54 = vrot.lane.b32.xlu0 %v53, 120
    %v55 = vpop.permute.xlu0 %54
    %vm56 = vcmask 64512
    %s57 = scalar_lea.vmem [#allocation0], 65
    %58 = vst.msk [vmem:[%s57] ss:$8 sm:$0xf] %vm56, %v55
    %s59 = scalar_lea.vmem [#allocation0], 65
    %60 = vst.msk [vmem:[%s59] ss:$8 sm:$0xf0] %vm56, %v55
    %v61 = vld [vmem:[#allocation1] sm:$0xff]
    %62 = vrot.lane.b32.xlu0 %v61, 112
    %v63 = vpop.permute.xlu0 %62
    %vm64 = vcmask 64512
    %s65 = scalar_lea.vmem [#allocation0], 2
    %66 = vst.msk [vmem:[%s65] ss:$8 sm:$0xf] %vm64, %v63
    %s67 = scalar_lea.vmem [#allocation0], 2
    %68 = vst.msk [vmem:[%s67] ss:$8 sm:$0xf0] %vm64, %v63
    %s69 = scalar_lea.vmem [#allocation1], 8
    %v70 = vld [vmem:[%s69] sm:$0xff]
    %71 = vrot.lane.b32.xlu0 %v70, 112
    %v72 = vpop.permute.xlu0 %71
    %vm73 = vcmask 64512
    %s74 = scalar_lea.vmem [#allocation0], 66
    %75 = vst.msk [vmem:[%s74] ss:$8 sm:$0xf] %vm73, %v72
    %s76 = scalar_lea.vmem [#allocation0], 66
    %77 = vst.msk [vmem:[%s76] ss:$8 sm:$0xf0] %vm73, %v72
    %v78 = vld [vmem:[#allocation1] sm:$0xff]
    %79 = vrot.lane.b32.xlu0 %v78, 104
    %v80 = vpop.permute.xlu0 %79
    %vm81 = vcmask 64512
    %s82 = scalar_lea.vmem [#allocation0], 3
    %83 = vst.msk [vmem:[%s82] ss:$8 sm:$0xf] %vm81, %v80
    %s84 = scalar_lea.vmem [#allocation0], 3
    %85 = vst.msk [vmem:[%s84] ss:$8 sm:$0xf0] %vm81, %v80
    %s86 = scalar_lea.vmem [#allocation1], 8
    %v87 = vld [vmem:[%s86] sm:$0xff]
    %88 = vrot.lane.b32.xlu0 %v87, 104
    %v89 = vpop.permute.xlu0 %88
    %vm90 = vcmask 64512
    %s91 = scalar_lea.vmem [#allocation0], 67
    %92 = vst.msk [vmem:[%s91] ss:$8 sm:$0xf] %vm90, %v89
    %s93 = scalar_lea.vmem [#allocation0], 67
    %94 = vst.msk [vmem:[%s93] ss:$8 sm:$0xf0] %vm90, %v89
    %s96 = smul.u32 2, 2
    %s97 = sshllo.u32 0, %s96
    %s98 = sshrl.u32 %s96, 1
    %v99 = vld [vmem:[#allocation0] sm:%s97]
    %v100 = vpack.c.bf16 0.0, %v99
    %s101 = sshllo.u32 0, %s98
    %102 = vst [vmem:[%s1] sm:%s101] %v100
    %s103 = scalar_lea.vmem [#allocation0], 8
    %v104 = vld [vmem:[%s103] sm:%s97]
    %v105 = vpack.c.bf16 0.0, %v104
    %s106 = sshllo.u32 0, %s98
    %s107 = scalar_lea.vmem %s1, 2
    %108 = vst [vmem:[%s107] sm:%s106] %v105
    %s109 = scalar_lea.vmem [#allocation0], 16
    %v110 = vld [vmem:[%s109] sm:%s97]
    %v111 = vpack.c.bf16 0.0, %v110
    %s112 = sshllo.u32 0, %s98
    %s113 = smul.addr 2, 2
    %s114 = scalar_lea.vmem %s1, %s113
    %115 = vst [vmem:[%s114] sm:%s112] %v111
    %s116 = scalar_lea.vmem [#allocation0], 24
    %v117 = vld [vmem:[%s116] sm:%s97]
    %v118 = vpack.c.bf16 0.0, %v117
    %s119 = sshllo.u32 0, %s98
    %s120 = smul.addr 2, 3
    %s121 = scalar_lea.vmem %s1, %s120
    %122 = vst [vmem:[%s121] sm:%s119] %v118
    %s123 = scalar_lea.vmem [#allocation0], 32
    %v124 = vld [vmem:[%s123] sm:%s97]
    %v125 = vpack.c.bf16 0.0, %v124
    %s126 = sshllo.u32 0, %s98
    %s127 = smul.addr 2, 4
    %s128 = scalar_lea.vmem %s1, %s127
    %129 = vst [vmem:[%s128] sm:%s126] %v125
    %s130 = scalar_lea.vmem [#allocation0], 40
    %v131 = vld [vmem:[%s130] sm:%s97]
    %v132 = vpack.c.bf16 0.0, %v131
    %s133 = sshllo.u32 0, %s98
    %s134 = smul.addr 2, 5
    %s135 = scalar_lea.vmem %s1, %s134
    %136 = vst [vmem:[%s135] sm:%s133] %v132
    %s137 = scalar_lea.vmem [#allocation0], 48
    %v138 = vld [vmem:[%s137] sm:%s97]
    %v139 = vpack.c.bf16 0.0, %v138
    %s140 = sshllo.u32 0, %s98
    %s141 = smul.addr 2, 6
    %s142 = scalar_lea.vmem %s1, %s141
    %143 = vst [vmem:[%s142] sm:%s140] %v139
    %s144 = scalar_lea.vmem [#allocation0], 56
    %v145 = vld [vmem:[%s144] sm:%s97]
    %v146 = vpack.c.bf16 0.0, %v145
    %s147 = sshllo.u32 0, %s98
    %s148 = smul.addr 2, 7
    %s149 = scalar_lea.vmem %s1, %s148
    %150 = vst [vmem:[%s149] sm:%s147] %v146
    %s151 = scalar_lea.vmem [#allocation0], 64
    %v152 = vld [vmem:[%s151] sm:%s97]
    %v153 = vpack.c.bf16 0.0, %v152
    %s154 = sshllo.u32 0, %s98
    %s155 = smul.addr 2, 8
    %s156 = scalar_lea.vmem %s1, %s155
    %157 = vst [vmem:[%s156] sm:%s154] %v153
    %s158 = scalar_lea.vmem [#allocation0], 72
    %v159 = vld [vmem:[%s158] sm:%s97]
    %v160 = vpack.c.bf16 0.0, %v159
    %s161 = sshllo.u32 0, %s98
    %s162 = smul.addr 2, 9
    %s163 = scalar_lea.vmem %s1, %s162
    %164 = vst [vmem:[%s163] sm:%s161] %v160
    %s165 = scalar_lea.vmem [#allocation0], 80
    %v166 = vld [vmem:[%s165] sm:%s97]
    %v167 = vpack.c.bf16 0.0, %v166
    %s168 = sshllo.u32 0, %s98
    %s169 = smul.addr 2, 10
    %s170 = scalar_lea.vmem %s1, %s169
    %171 = vst [vmem:[%s170] sm:%s168] %v167
    %s172 = scalar_lea.vmem [#allocation0], 88
    %v173 = vld [vmem:[%s172] sm:%s97]
    %v174 = vpack.c.bf16 0.0, %v173
    %s175 = sshllo.u32 0, %s98
    %s176 = smul.addr 2, 11
    %s177 = scalar_lea.vmem %s1, %s176
    %178 = vst [vmem:[%s177] sm:%s175] %v174
    %s179 = scalar_lea.vmem [#allocation0], 96
    %v180 = vld [vmem:[%s179] sm:%s97]
    %v181 = vpack.c.bf16 0.0, %v180
    %s182 = sshllo.u32 0, %s98
    %s183 = smul.addr 2, 12
    %s184 = scalar_lea.vmem %s1, %s183
    %185 = vst [vmem:[%s184] sm:%s182] %v181
    %s186 = scalar_lea.vmem [#allocation0], 104
    %v187 = vld [vmem:[%s186] sm:%s97]
    %v188 = vpack.c.bf16 0.0, %v187
    %s189 = sshllo.u32 0, %s98
    %s190 = smul.addr 2, 13
    %s191 = scalar_lea.vmem %s1, %s190
    %192 = vst [vmem:[%s191] sm:%s189] %v188
    %s193 = scalar_lea.vmem [#allocation0], 112
    %v194 = vld [vmem:[%s193] sm:%s97]
    %v195 = vpack.c.bf16 0.0, %v194
    %s196 = sshllo.u32 0, %s98
    %s197 = smul.addr 2, 14
    %s198 = scalar_lea.vmem %s1, %s197
    %199 = vst [vmem:[%s198] sm:%s196] %v195
    %s200 = scalar_lea.vmem [#allocation0], 120
    %v201 = vld [vmem:[%s200] sm:%s97]
    %v202 = vpack.c.bf16 0.0, %v201
    %s203 = sshllo.u32 0, %s98
    %s204 = smul.addr 2, 15
    %s205 = scalar_lea.vmem %s1, %s204
    %206 = vst [vmem:[%s205] sm:%s203] %v202

// kernel: squeeze.23
$region0: #{squeeze.23}
  %s0 = inlined_call_operand.vmem [shape: f32[16,4], index: 0, kind: input, shape index: {}]
  %s1 = inlined_call_operand.vmem [shape: f32[2,8,4,1], index: 1, kind: output, shape index: {}]
  $region1: #{squeeze.23} parent=0
    #allocation0 [shape = 'u8[16384]{0}', space=vmem, size = 0x4000, scoped, tag = 'scoped mem for output reshape']
    #allocation1 [shape = 'u8[4096]{0}', space=vmem, size = 0x1000, scoped, tag = 'scoped mem for input reshape']
    %s3 = sshllo.u32 0, 4
    %v4 = vld [vmem:[%s0] sm:%s3]
    %5 = vst [vmem:[#allocation1] sm:%s3] %v4
    %v6 = vld [vmem:[#allocation1] sm:$0xf]
    %vm7 = vcmask 64512
    %8 = vst.msk [vmem:[#allocation0] ss:$8 sm:$0xf] %vm7, %v6
    %v9 = vld [vmem:[#allocation1] sm:$0xf]
    %10 = vrot.lane.b32.xlu0 %v9, 120
    %v11 = vpop.permute.xlu0 %10
    %vm12 = vcmask 64512
    %s13 = scalar_lea.vmem [#allocation0], 1
    %14 = vst.msk [vmem:[%s13] ss:$8 sm:$0xf] %vm12, %v11
    %s16 = sshllo.u32 0, 2
    %v18 = vld [vmem:[#allocation0] sm:%s16]
    %s19 = sshllo.u32 0, 2
    %20 = vst [vmem:[%s1] sm:%s19] %v18
    %s21 = scalar_lea.vmem [#allocation0], 8
    %v22 = vld [vmem:[%s21] sm:%s16]
    %s23 = sshllo.u32 0, 2
    %s24 = scalar_lea.vmem %s1, 2
    %25 = vst [vmem:[%s24] sm:%s23] %v22
    %s26 = scalar_lea.vmem [#allocation0], 16
    %v27 = vld [vmem:[%s26] sm:%s16]
    %s28 = sshllo.u32 0, 2
    %s29 = smul.addr 2, 2
    %s30 = scalar_lea.vmem %s1, %s29
    %31 = vst [vmem:[%s30] sm:%s28] %v27
    %s32 = scalar_lea.vmem [#allocation0], 24
    %v33 = vld [vmem:[%s32] sm:%s16]
    %s34 = sshllo.u32 0, 2
    %s35 = smul.addr 2, 3
    %s36 = scalar_lea.vmem %s1, %s35
    %37 = vst [vmem:[%s36] sm:%s34] %v33

// kernel: scnn_forward.2
$region0: #{scnn_forward.2}
  #allocation0 [shape = 'u32[]', space=smem, size = 0x4, offset = 0x4, fixed_abs, tag = 'smem constant byte address 0x4 - core index']
  #allocation1 [shape = 'u32[144,128]{1,0:T(1,128)}', space=vmem, size = 0x12000, scoped, tag = 'internal scratch']
  %s0 = inlined_call_operand.vmem [shape: bf16[384,208], index: 0, kind: input, shape index: {}]
  %s1 = inlined_call_operand.vmem [shape: bf16[208,8], index: 1, kind: input, shape index: {}]
  %s2 = inlined_call_operand.vmem [shape: bf16[208,8], index: 2, kind: input, shape index: {}]
  %s3 = inlined_call_operand.vmem [shape: f32[1,8], index: 3, kind: input, shape index: {}]
  %s4 = inlined_call_operand.vmem [shape: f32[1,8], index: 4, kind: input, shape index: {}]
  %s5 = inlined_call_operand.vmem [shape: f32[384,8], index: 5, kind: output, shape index: {}]
  %s6 = sld [smem:[#allocation0]]
  $region101: #{scnn_forward.2} parent=0
    _
  %s8 = ssub.s32 1, %s6
  %s9 = scalar_select 0, %s8, %s6
  $region1: #{scnn_forward.2} parent=0
    #allocation2 [shape = 'u8[262144]{0}', space=vmem, size = 0x40000, scoped, tag = 'output window, operand 0']
    loop: start=0, step=1, limit=4
    $region2: #{scnn_forward.2} parent=1 // loop_pre_header
      _
    $region3: #{scnn_forward.2} parent=1 // loop_header
      %s11 = sphi 0, %s15
      %p12 = scmp.ge.s32.totalorder %s11, 4
      %s21 = sphi 0, %s23
      %s24 = sphi 0, %s21
      %s25 = sphi 0, %s24
      %s41 = sphi 0, %s25
      %s45 = sphi 0, %s45
      %s47 = sphi 0, %s45
      %s48 = sphi 0, %s47
      %s62 = sphi 0, %s48
      %s66 = sphi 0, %s66
      %s68 = sphi 0, %s66
      %s69 = sphi 0, %s68
      %s83 = sphi 0, %s69
      %s87 = sphi 0, %s87
      %s89 = sphi 0, %s87
      %s90 = sphi 0, %s89
      %s104 = sphi 0, %s90
      %s108 = sphi 0, %s108
      %s110 = sphi 0, %s108
      %s111 = sphi 0, %s110
      %s125 = sphi 0, %s111
      %s131 = sphi 0, %s133
      %s134 = sphi 0, %s131
      %s135 = sphi 0, %s134
      %s151 = sphi 0, %s135
    $region4: #{scnn_forward.2} parent=1 // loop_header_branch
      %14 = sbr.rel (%p12) target = $region8
    $region5: #{scnn_forward.2} parent=1 // loop_body
      %s16 = ssub.s32 %s11, 1
      %s17 = ssub.s32 %s11, 2
      %s18 = sadd.s32 %s11, 1
      %s19 = ssub.s32 %s11, %s18
      %p20 = scmp.eq.s32.totalorder %s19, 0
      %s22 = sadd.s32 %s21, 1
      %s23 = scalar_select %p20, %s21, %s22
      %p26 = pneg %p20
      %p27 = scmp.eq.s32.totalorder %s11, 1
      %p28 = por %p26, %p27
      %p29 = scmp.ne.s32.totalorder %s21, %s24
      %p30 = scmp.eq.s32.totalorder %s11, 0
      %p31 = por %p29, %p30
      %p32 = scmp.ne.s32.totalorder %s21, %s24
      %p33 = scmp.eq.s32.totalorder %s16, 1
      %p34 = por %p32, %p33
      %p35 = scmp.ne.s32.totalorder %s24, %s25
      %p36 = scmp.eq.s32.totalorder %s16, 0
      %p37 = por %p35, %p36
      %p38 = scmp.ne.s32.totalorder %s24, %s25
      %p39 = scmp.eq.s32.totalorder %s17, 1
      %p40 = por %p38, %p39
      %p42 = scmp.ne.s32.totalorder %s25, %s41
      %p43 = scmp.eq.s32.totalorder %s17, 0
      %p44 = por %p42, %p43
      %s46 = sadd.s32 %s45, 1
      %p49 = scmp.eq.s32.totalorder %s11, 1
      %p50 = scmp.ne.s32.totalorder %s45, %s47
      %p51 = scmp.eq.s32.totalorder %s11, 0
      %p52 = por %p50, %p51
      %p53 = scmp.ne.s32.totalorder %s45, %s47
      %p54 = scmp.eq.s32.totalorder %s16, 1
      %p55 = por %p53, %p54
      %p56 = scmp.ne.s32.totalorder %s47, %s48
      %p57 = scmp.eq.s32.totalorder %s16, 0
      %p58 = por %p56, %p57
      %p59 = scmp.ne.s32.totalorder %s47, %s48
      %p60 = scmp.eq.s32.totalorder %s17, 1
      %p61 = por %p59, %p60
      %p63 = scmp.ne.s32.totalorder %s48, %s62
      %p64 = scmp.eq.s32.totalorder %s17, 0
      %p65 = por %p63, %p64
      %s67 = sadd.s32 %s66, 1
      %p70 = scmp.eq.s32.totalorder %s11, 1
      %p71 = scmp.ne.s32.totalorder %s66, %s68
      %p72 = scmp.eq.s32.totalorder %s11, 0
      %p73 = por %p71, %p72
      %p74 = scmp.ne.s32.totalorder %s66, %s68
      %p75 = scmp.eq.s32.totalorder %s16, 1
      %p76 = por %p74, %p75
      %p77 = scmp.ne.s32.totalorder %s68, %s69
      %p78 = scmp.eq.s32.totalorder %s16, 0
      %p79 = por %p77, %p78
      %p80 = scmp.ne.s32.totalorder %s68, %s69
      %p81 = scmp.eq.s32.totalorder %s17, 1
      %p82 = por %p80, %p81
      %p84 = scmp.ne.s32.totalorder %s69, %s83
      %p85 = scmp.eq.s32.totalorder %s17, 0
      %p86 = por %p84, %p85
      %s88 = sadd.s32 %s87, 1
      %p91 = scmp.eq.s32.totalorder %s11, 1
      %p92 = scmp.ne.s32.totalorder %s87, %s89
      %p93 = scmp.eq.s32.totalorder %s11, 0
      %p94 = por %p92, %p93
      %p95 = scmp.ne.s32.totalorder %s87, %s89
      %p96 = scmp.eq.s32.totalorder %s16, 1
      %p97 = por %p95, %p96
      %p98 = scmp.ne.s32.totalorder %s89, %s90
      %p99 = scmp.eq.s32.totalorder %s16, 0
      %p100 = por %p98, %p99
      %p101 = scmp.ne.s32.totalorder %s89, %s90
      %p102 = scmp.eq.s32.totalorder %s17, 1
      %p103 = por %p101, %p102
      %p105 = scmp.ne.s32.totalorder %s90, %s104
      %p106 = scmp.eq.s32.totalorder %s17, 0
      %p107 = por %p105, %p106
      %s109 = sadd.s32 %s108, 1
      %p112 = scmp.eq.s32.totalorder %s11, 1
      %p113 = scmp.ne.s32.totalorder %s108, %s110
      %p114 = scmp.eq.s32.totalorder %s11, 0
      %p115 = por %p113, %p114
      %p116 = scmp.ne.s32.totalorder %s108, %s110
      %p117 = scmp.eq.s32.totalorder %s16, 1
      %p118 = por %p116, %p117
      %p119 = scmp.ne.s32.totalorder %s110, %s111
      %p120 = scmp.eq.s32.totalorder %s16, 0
      %p121 = por %p119, %p120
      %p122 = scmp.ne.s32.totalorder %s110, %s111
      %p123 = scmp.eq.s32.totalorder %s17, 1
      %p124 = por %p122, %p123
      %p126 = scmp.ne.s32.totalorder %s111, %s125
      %p127 = scmp.eq.s32.totalorder %s17, 0
      %p128 = por %p126, %p127
      %s129 = ssub.s32 %s11, %s18
      %p130 = scmp.eq.s32.totalorder %s129, 0
      %s132 = sadd.s32 %s131, 1
      %s133 = scalar_select %p130, %s131, %s132
      %p136 = pneg %p130
      %p137 = scmp.eq.s32.totalorder %s11, 1
      %p138 = por %p136, %p137
      %p139 = scmp.ne.s32.totalorder %s131, %s134
      %p140 = scmp.eq.s32.totalorder %s11, 0
      %p141 = por %p139, %p140
      %p142 = scmp.ne.s32.totalorder %s131, %s134
      %p143 = scmp.eq.s32.totalorder %s16, 1
      %p144 = por %p142, %p143
      %p145 = scmp.ne.s32.totalorder %s134, %s135
      %p146 = scmp.eq.s32.totalorder %s16, 0
      %p147 = por %p145, %p146
      %p148 = scmp.ne.s32.totalorder %s134, %s135
      %p149 = scmp.eq.s32.totalorder %s17, 1
      %p150 = por %p148, %p149
      %p152 = scmp.ne.s32.totalorder %s135, %s151
      %p153 = scmp.eq.s32.totalorder %s17, 0
      %p154 = por %p152, %p153
      %p155 = scmp.le.s32.totalorder 1, %s11
      %p156 = scmp.lt.s32.totalorder %s11, 3
      %p157 = pnand %p155, %p156
      %p158 = pneg %p157
      // Predicated region
      $region9: #{scnn_forward.2} parent=5 // pred_check
        _
      $region10: #{scnn_forward.2} parent=5 // pred_check_branch
        %160 = sbr.rel (%p157) target = $region12
      $region11: #{scnn_forward.2} parent=5 // pred_region
        %s161 = ssub.s32 %s11, 1
        // Predicated region
        $region13: #{scnn_forward.2} parent=11 // pred_check
          %p162 = pneg %p58
        $region14: #{scnn_forward.2} parent=11 // pred_check_branch
          %164 = sbr.rel (%p162) target = $region16
        $region15: #{scnn_forward.2} parent=11 // pred_region
          _
        $region16: #{scnn_forward.2} parent=11 // pred_fallthru
          _
        // Predicated region
        $region17: #{scnn_forward.2} parent=11 // pred_check
          %p165 = pneg %p79
        $region18: #{scnn_forward.2} parent=11 // pred_check_branch
          %167 = sbr.rel (%p165) target = $region20
        $region19: #{scnn_forward.2} parent=11 // pred_region
          _
        $region20: #{scnn_forward.2} parent=11 // pred_fallthru
          _
        // Predicated region
        $region21: #{scnn_forward.2} parent=11 // pred_check
          %p168 = pneg %p100
        $region22: #{scnn_forward.2} parent=11 // pred_check_branch
          %170 = sbr.rel (%p168) target = $region24
        $region23: #{scnn_forward.2} parent=11 // pred_region
          _
        $region24: #{scnn_forward.2} parent=11 // pred_fallthru
          _
        // Predicated region
        $region25: #{scnn_forward.2} parent=11 // pred_check
          %p171 = pneg %p121
        $region26: #{scnn_forward.2} parent=11 // pred_check_branch
          %173 = sbr.rel (%p171) target = $region28
        $region27: #{scnn_forward.2} parent=11 // pred_region
          _
        $region28: #{scnn_forward.2} parent=11 // pred_fallthru
          _
      $region12: #{scnn_forward.2} parent=5 // pred_fallthru
        _
      %p174 = scmp.lt.s32.totalorder %s11, 2
      // Predicated region
      $region29: #{scnn_forward.2} parent=5 // pred_check
        %p175 = pneg %p174
      $region30: #{scnn_forward.2} parent=5 // pred_check_branch
        %177 = sbr.rel (%p175) target = $region32
      $region31: #{scnn_forward.2} parent=5 // pred_region
        // Predicated region
        $region33: #{scnn_forward.2} parent=31 // pred_check
          %p178 = pneg %p31
        $region34: #{scnn_forward.2} parent=31 // pred_check_branch
          %180 = sbr.rel (%p178) target = $region36
        $region35: #{scnn_forward.2} parent=31 // pred_region
          %s181 = smul.u32 32, %s11
          %s182 = ssub.s32 48, %s181
          %p183 = scmp.lt.s32.totalorder %s182, 32
          %s184 = scalar_select %p183, %s182, 32
          %s185 = smul.u32 64, %s184
          %s186 = smul.u32 %s185, 2
          %p187 = scmp.lt.s32.totalorder %s181, 47
          %s188 = scalar_select %p187, %s181, 47
          %s189 = smul.addr %s188, 2
          %s190 = smul.addr %s189, 4
          %s191 = scalar_lea.vmem %s0, %s190
          %s192 = smul.u32 32, %s11
          %s193 = ssub.s32 48, %s192
          %p194 = scmp.lt.s32.totalorder %s193, 32
          %s195 = scalar_select %p194, %s193, 32
          %s196 = smul.u32 64, %s195
          %s197 = smul.u32 %s196, 2
        $region36: #{scnn_forward.2} parent=31 // pred_fallthru
          _
      $region32: #{scnn_forward.2} parent=5 // pred_fallthru
        _
      %p198 = scmp.le.s32.totalorder 1, %s11
      %p199 = scmp.lt.s32.totalorder %s11, 3
      %p200 = pnand %p198, %p199
      %p201 = pneg %p200
      // Predicated region
      $region37: #{scnn_forward.2} parent=5 // pred_check
        _
      $region38: #{scnn_forward.2} parent=5 // pred_check_branch
        %203 = sbr.rel (%p200) target = $region40
      $region39: #{scnn_forward.2} parent=5 // pred_region
        %s204 = ssub.s32 %s11, 1
        %s205 = smul.u32 32, %s16
        %s206 = ssub.s32 48, %s205
        %p207 = scmp.lt.s32.totalorder %s206, 32
        %s208 = scalar_select %p207, %s206, 32
        %s209 = smul.u32 64, %s208
        %s210 = smul.u32 %s209, 2
        %p211 = scmp.lt.s32.totalorder %s205, 47
        %s212 = scalar_select %p211, %s205, 47
        %s213 = smul.addr %s212, 2
        %s214 = smul.addr %s213, 4
        %s215 = scalar_lea.vmem %s0, %s214
        %p216 = pneg %p37
        %p217 = pneg %p34
        %p218 = pneg %p58
        %p219 = pneg %p55
        %p220 = pneg %p79
        %p221 = pneg %p76
        %p222 = pneg %p100
        %p223 = pneg %p97
        %p224 = pneg %p121
        %p225 = pneg %p118
        %p226 = pneg %p147
        %p227 = pneg %p144
        %s228 = sand.u32 %s134, 1
        %s229 = sand.u32 %s134, 1
        %s230 = smul.addr %s229, 256
        %s231 = scalar_lea.vmem [#allocation2], %s230
        %s232 = smul.u32 32, %s16
        %s233 = ssub.s32 48, %s232
        %p234 = scmp.lt.s32.totalorder %s233, 32
        %s235 = scalar_select %p234, %s233, 32
        %s236 = smul.u32 64, %s235
        %s237 = smul.u32 %s236, 2
        %p238 = scmp.lt.s32.totalorder %s232, 47
        %s239 = scalar_select %p238, %s232, 47
        %s240 = smul.addr %s239, 2
        %s241 = smul.addr %s240, 4
        %s242 = scalar_lea.vmem %s0, %s241
        %s243 = smul.u32 32, %s16
        %s244 = ssub.s32 48, %s243
        %p245 = scmp.lt.s32.totalorder %s244, 32
        %s246 = scalar_select %p245, %s244, 32
        %s247 = smul.u32 64, %s246
        %s248 = smul.u32 %s247, 2
        %s249 = smul.u32 32, %s16
        %s250 = ssub.s32 48, %s249
        %p251 = scmp.lt.s32.totalorder %s250, 32
        %s252 = scalar_select %p251, %s250, 32
        %s253 = smul.u32 128, %s252
        %v255 = vld [vmem:[%s242] sm:$0xff]
        %v256 = vld [vmem:[%s242 + $0x8] sm:$0xff]
        %v257 = vld [vmem:[%s242 + $0x10] sm:$0xff]
        %v258 = vld [vmem:[%s242 + $0x18] sm:$0xff]
        %v259 = vld [vmem:[%s242 + $0x20] sm:$0xff]
        %v260 = vld [vmem:[%s242 + $0x28] sm:$0xff]
        %v261 = vld [vmem:[%s242 + $0x30] sm:$0xff]
        %v262 = vld [vmem:[%s242 + $0x38] sm:$0xff]
        %v263 = vld [vmem:[%s242 + $0x40] sm:$0xff]
        %v264 = vld [vmem:[%s242 + $0x48] sm:$0xff]
        %v265 = vld [vmem:[%s242 + $0x50] sm:$0xff]
        %v266 = vld [vmem:[%s242 + $0x58] sm:$0xff]
        %v267 = vld [vmem:[%s242 + $0x60] sm:$0xff]
        %v268 = vld [vmem:[%s242 + $0x68] sm:$0xff]
        %v269 = vld [vmem:[%s242 + $0x70] sm:$0xff]
        %v270 = vld [vmem:[%s242 + $0x78] sm:$0xff]
        %v271 = vld [vmem:[%s242 + $0x80] sm:$0xff]
        %v272 = vld [vmem:[%s242 + $0x88] sm:$0xff]
        %v273 = vld [vmem:[%s242 + $0x90] sm:$0xff]
        %v274 = vld [vmem:[%s242 + $0x98] sm:$0xff]
        %v275 = vld [vmem:[%s242 + $0xa0] sm:$0xff]
        %v276 = vld [vmem:[%s242 + $0xa8] sm:$0xff]
        %v277 = vld [vmem:[%s242 + $0xb0] sm:$0xff]
        %v278 = vld [vmem:[%s242 + $0xb8] sm:$0xff]
        %v279 = vld [vmem:[%s242 + $0xc0] sm:$0xff]
        %v280 = vld [vmem:[%s242 + $0xc8] sm:$0xff]
        %v281 = vld [vmem:[%s242 + $0xd0] sm:$0xff]
        %v282 = vld [vmem:[%s242 + $0xd8] sm:$0xff]
        %v283 = vld [vmem:[%s242 + $0xe0] sm:$0xff]
        %v284 = vld [vmem:[%s242 + $0xe8] sm:$0xff]
        %v285 = vld [vmem:[%s242 + $0xf0] sm:$0xff]
        %v286 = vld [vmem:[%s242 + $0xf8] sm:$0xff]
        %v287 = vld [vmem:[%s1] sm:$0xf]
        %v288 = vld [vmem:[%s1 + $0x4] sm:$0xf]
        %v289 = vld [vmem:[%s1 + $0x8] sm:$0xf]
        %v290 = vld [vmem:[%s1 + $0xc] sm:$0xf]
        %v291 = vld [vmem:[%s1 + $0x10] sm:$0xf]
        %v292 = vld [vmem:[%s1 + $0x14] sm:$0xf]
        %v293 = vld [vmem:[%s1 + $0x18] sm:$0xf]
        %v294 = vld [vmem:[%s1 + $0x1c] sm:$0xf]
        %v295 = vld [vmem:[%s1 + $0x20] sm:$0xf]
        %v296 = vld [vmem:[%s1 + $0x24] sm:$0xf]
        %v297 = vld [vmem:[%s1 + $0x28] sm:$0xf]
        %v298 = vld [vmem:[%s1 + $0x2c] sm:$0xf]
        %v299 = vld [vmem:[%s1 + $0x30] sm:$0xf]
        %v300 = vld [vmem:[%s1 + $0x34] sm:$0xf]
        %v301 = vld [vmem:[%s1 + $0x38] sm:$0xf]
        %v302 = vld [vmem:[%s1 + $0x3c] sm:$0xf]
        %v303 = vld [vmem:[%s1 + $0x40] sm:$0xf]
        %v304 = vld [vmem:[%s1 + $0x44] sm:$0xf]
        %v305 = vld [vmem:[%s1 + $0x48] sm:$0xf]
        %v306 = vld [vmem:[%s1 + $0x4c] sm:$0xf]
        %v307 = vld [vmem:[%s1 + $0x50] sm:$0xf]
        %v308 = vld [vmem:[%s1 + $0x54] sm:$0xf]
        %v309 = vld [vmem:[%s1 + $0x58] sm:$0xf]
        %v310 = vld [vmem:[%s1 + $0x5c] sm:$0xf]
        %v311 = vld [vmem:[%s1 + $0x60] sm:$0xf]
        %v312 = vld [vmem:[%s1 + $0x64] sm:$0xf]
        %v313 = vld [vmem:[%s3] sm:$0x1]
        %v315 = vlaneseq
        %v316 = vshrl.u32 %v315, 7
        %v317 = vsub.s32 0, %v316
        %v318 = vrot.slane %v313, %v317
        %v352 = vunpack.c.l.b16 %v255
        %v353 = vunpack.c.h.b16 %v255
        %v354 = vunpack.c.l.b16 %v256
        %v355 = vunpack.c.h.b16 %v256
        %v356 = vunpack.c.l.b16 %v257
        %v357 = vunpack.c.h.b16 %v257
        %v358 = vunpack.c.l.b16 %v258
        %v359 = vunpack.c.h.b16 %v258
        %v360 = vunpack.c.l.b16 %v259
        %v361 = vunpack.c.h.b16 %v259
        %v362 = vunpack.c.l.b16 %v260
        %v363 = vunpack.c.h.b16 %v260
        %v364 = vunpack.c.l.b16 %v261
        %v365 = vunpack.c.h.b16 %v261
        %v366 = vunpack.c.l.b16 %v262
        %v367 = vunpack.c.h.b16 %v262
        %v368 = vunpack.c.l.b16 %v263
        %v369 = vunpack.c.h.b16 %v263
        %v370 = vunpack.c.l.b16 %v264
        %v371 = vunpack.c.h.b16 %v264
        %v372 = vunpack.c.l.b16 %v265
        %v373 = vunpack.c.h.b16 %v265
        %v374 = vunpack.c.l.b16 %v266
        %v375 = vunpack.c.h.b16 %v266
        %v376 = vunpack.c.l.b16 %v267
        %v377 = vunpack.c.h.b16 %v267
        %v378 = vunpack.c.l.b16 %v268
        %v379 = vunpack.c.h.b16 %v268
        %v380 = vunpack.c.l.b16 %v269
        %v381 = vunpack.c.h.b16 %v269
        %v382 = vunpack.c.l.b16 %v270
        %v383 = vunpack.c.h.b16 %v270
        %v384 = vunpack.c.l.b16 %v271
        %v385 = vunpack.c.h.b16 %v271
        %v386 = vunpack.c.l.b16 %v272
        %v387 = vunpack.c.h.b16 %v272
        %v388 = vunpack.c.l.b16 %v273
        %v389 = vunpack.c.h.b16 %v273
        %v390 = vunpack.c.l.b16 %v274
        %v391 = vunpack.c.h.b16 %v274
        %v392 = vunpack.c.l.b16 %v275
        %v393 = vunpack.c.h.b16 %v275
        %v394 = vunpack.c.l.b16 %v276
        %v395 = vunpack.c.h.b16 %v276
        %v396 = vunpack.c.l.b16 %v277
        %v397 = vunpack.c.h.b16 %v277
        %v398 = vunpack.c.l.b16 %v278
        %v399 = vunpack.c.h.b16 %v278
        %v400 = vunpack.c.l.b16 %v279
        %v401 = vunpack.c.h.b16 %v279
        %v402 = vunpack.c.l.b16 %v280
        %v403 = vunpack.c.h.b16 %v280
        %v404 = vunpack.c.l.b16 %v281
        %v405 = vunpack.c.h.b16 %v281
        %v406 = vunpack.c.l.b16 %v282
        %v407 = vunpack.c.h.b16 %v282
        %v408 = vunpack.c.l.b16 %v283
        %v409 = vunpack.c.h.b16 %v283
        %v410 = vunpack.c.l.b16 %v284
        %v411 = vunpack.c.h.b16 %v284
        %v412 = vunpack.c.l.b16 %v285
        %v413 = vunpack.c.h.b16 %v285
        %v414 = vunpack.c.l.b16 %v286
        %v415 = vunpack.c.h.b16 %v286
        %v416 = vpack.c.b16 %v354, %v352
        %v417 = vpack.c.b16 %v355, %v353
        %v418 = vpack.c.b16 %v358, %v356
        %v419 = vpack.c.b16 %v359, %v357
        %v420 = vpack.c.b16 %v362, %v360
        %v421 = vpack.c.b16 %v363, %v361
        %v422 = vpack.c.b16 %v366, %v364
        %v423 = vpack.c.b16 %v367, %v365
        %v424 = vpack.c.b16 %v370, %v368
        %v425 = vpack.c.b16 %v371, %v369
        %v426 = vpack.c.b16 %v374, %v372
        %v427 = vpack.c.b16 %v375, %v373
        %v428 = vpack.c.b16 %v378, %v376
        %v429 = vpack.c.b16 %v379, %v377
        %v430 = vpack.c.b16 %v382, %v380
        %v431 = vpack.c.b16 %v383, %v381
        %v432 = vpack.c.b16 %v386, %v384
        %v433 = vpack.c.b16 %v387, %v385
        %v434 = vpack.c.b16 %v390, %v388
        %v435 = vpack.c.b16 %v391, %v389
        %v436 = vpack.c.b16 %v394, %v392
        %v437 = vpack.c.b16 %v395, %v393
        %v438 = vpack.c.b16 %v398, %v396
        %v439 = vpack.c.b16 %v399, %v397
        %v440 = vpack.c.b16 %v402, %v400
        %v441 = vpack.c.b16 %v403, %v401
        %v442 = vpack.c.b16 %v406, %v404
        %v443 = vpack.c.b16 %v407, %v405
        %v444 = vpack.c.b16 %v410, %v408
        %v445 = vpack.c.b16 %v411, %v409
        %v446 = vpack.c.b16 %v414, %v412
        %v447 = vpack.c.b16 %v415, %v413
        %v490 = vunpack.c.l.b16 %v287
        %v491 = vunpack.c.l.b16 %v288
        %v492 = vunpack.c.l.b16 %v289
        %v493 = vunpack.c.l.b16 %v290
        %v494 = vunpack.c.l.b16 %v291
        %v495 = vunpack.c.l.b16 %v292
        %v496 = vunpack.c.l.b16 %v293
        %v497 = vunpack.c.l.b16 %v294
        %v498 = vunpack.c.l.b16 %v295
        %v499 = vunpack.c.l.b16 %v296
        %v500 = vunpack.c.l.b16 %v297
        %v501 = vunpack.c.l.b16 %v298
        %v502 = vunpack.c.l.b16 %v299
        %v503 = vunpack.c.l.b16 %v300
        %v504 = vunpack.c.l.b16 %v301
        %v505 = vunpack.c.l.b16 %v302
        %v506 = vunpack.c.l.b16 %v303
        %v507 = vunpack.c.l.b16 %v304
        %v508 = vunpack.c.l.b16 %v305
        %v509 = vunpack.c.l.b16 %v306
        %v510 = vunpack.c.l.b16 %v307
        %v511 = vunpack.c.l.b16 %v308
        %v512 = vunpack.c.l.b16 %v309
        %v513 = vunpack.c.l.b16 %v310
        %v514 = vunpack.c.l.b16 %v311
        %v515 = vunpack.c.l.b16 %v312
        %v516 = vpack.c.b16 %v491, %v490
        %v517 = vpack.c.b16 %v493, %v492
        %v518 = vpack.c.b16 %v495, %v494
        %v519 = vpack.c.b16 %v497, %v496
        %v520 = vpack.c.b16 %v499, %v498
        %v521 = vpack.c.b16 %v501, %v500
        %v522 = vpack.c.b16 %v503, %v502
        %v523 = vpack.c.b16 %v505, %v504
        %v524 = vpack.c.b16 %v507, %v506
        %v525 = vpack.c.b16 %v509, %v508
        %v526 = vpack.c.b16 %v511, %v510
        %v527 = vpack.c.b16 %v513, %v512
        %v528 = vpack.c.b16 %v515, %v514
        %vm542 = vcmask 654336
        %v544 = vsel %vm542, %v417, 0
        %v547 = vsel %vm542, %v419, 0
        %v550 = vsel %vm542, %v421, 0
        %v553 = vsel %vm542, %v423, 0
        %v556 = vsel %vm542, %v425, 0
        %v559 = vsel %vm542, %v427, 0
        %v562 = vsel %vm542, %v429, 0
        %v565 = vsel %vm542, %v431, 0
        %v568 = vsel %vm542, %v433, 0
        %v571 = vsel %vm542, %v435, 0
        %v574 = vsel %vm542, %v437, 0
        %v577 = vsel %vm542, %v439, 0
        %v580 = vsel %vm542, %v441, 0
        %v583 = vsel %vm542, %v443, 0
        %v586 = vsel %vm542, %v445, 0
        %v589 = vsel %vm542, %v447, 0
        %591 = vmatprep.subr.bf16.mxu0 0
        %592 = vmatpush1.bf16.msra.mxu0 %v516
        %593 = vmatprep.subr.bf16.mxu0 0
        %594 = vmatpush1.bf16.msra.mxu0 %v517
        %595 = vmatprep.subr.bf16.mxu0 0
        %596 = vmatpush1.bf16.msra.mxu0 %v518
        %597 = vmatprep.subr.bf16.mxu0 0
        %598 = vmatpush1.bf16.msra.mxu0 %v519
        %599 = vmatprep.subr.bf16.mxu0 0
        %600 = vmatpush1.bf16.msra.mxu0 %v520
        %601 = vmatprep.subr.bf16.mxu0 0
        %602 = vmatpush1.bf16.msra.mxu0 %v521
        %603 = vmatprep.subr.bf16.mxu0 0
        %604 = vmatpush1.bf16.msra.mxu0 %v522
        %605 = vmatprep.subr.bf16.mxu0 0
        %606 = vmatpush1.bf16.msra.mxu0 %v523
        %607 = vmatprep.subr.bf16.mxu0 0
        %608 = vmatpush1.bf16.msra.mxu0 %v524
        %609 = vmatprep.subr.bf16.mxu0 0
        %610 = vmatpush1.bf16.msra.mxu0 %v525
        %611 = vmatprep.subr.bf16.mxu0 0
        %612 = vmatpush1.bf16.msra.mxu0 %v526
        %613 = vmatprep.subr.bf16.mxu0 0
        %614 = vmatpush1.bf16.msra.mxu0 %v527
        %615 = vmatprep.subr.bf16.mxu0 0
        %616 = vmatpush1.bf16.msra.mxu0 %v528
        %617 = vmatprep.subr.bf16.mxu0 0
        %618 = vmatpush1.bf16.msra.mxu0 0
        %619 = vmatprep.subr.bf16.mxu0 0
        %620 = vmatpush1.bf16.msra.mxu0 0
        %621 = vmatprep.subr.bf16.mxu0 0
        %622 = vmatpush1.bf16.msra.mxu0 0
        %623 = vmatprep.mubr.bf16.mxu0 %v544
        %624 = vmatmul.mubr.bf16.gmra.mrb[0].mxu0 %v416
        %v625 = vpop.f32.mrb[0].mxu0
        %v626 = vadd.f32 %v318, %v625
        %v627 = vpop.f32.mrb[0].mxu0
        %v628 = vpop.f32.mrb[0].mxu0
        %v629 = vadd.f32 %v318, %v628
        %v630 = vpop.f32.mrb[0].mxu0
        %631 = vmatprep.mubr.bf16.mxu0 %v547
        %632 = vmatmul.mubr.bf16.gmra.mrb[0].mxu0 %v418
        %v633 = vpop.f32.mrb[0].mxu0
        %v634 = vadd.f32 %v318, %v633
        %v635 = vpop.f32.mrb[0].mxu0
        %v636 = vpop.f32.mrb[0].mxu0
        %v637 = vadd.f32 %v318, %v636
        %v638 = vpop.f32.mrb[0].mxu0
        %639 = vmatprep.mubr.bf16.mxu0 %v550
        %640 = vmatmul.mubr.bf16.gmra.mrb[0].mxu0 %v420
        %v641 = vpop.f32.mrb[0].mxu0
        %v642 = vadd.f32 %v318, %v641
        %v643 = vpop.f32.mrb[0].mxu0
        %v644 = vpop.f32.mrb[0].mxu0
        %v645 = vadd.f32 %v318, %v644
        %v646 = vpop.f32.mrb[0].mxu0
        %647 = vmatprep.mubr.bf16.mxu0 %v553
        %648 = vmatmul.mubr.bf16.gmra.mrb[0].mxu0 %v422
        %v649 = vpop.f32.mrb[0].mxu0
        %v650 = vadd.f32 %v318, %v649
        %v651 = vpop.f32.mrb[0].mxu0
        %v652 = vpop.f32.mrb[0].mxu0
        %v653 = vadd.f32 %v318, %v652
        %v654 = vpop.f32.mrb[0].mxu0
        %655 = vmatprep.mubr.bf16.mxu0 %v556
        %656 = vmatmul.mubr.bf16.gmra.mrb[0].mxu0 %v424
        %v657 = vpop.f32.mrb[0].mxu0
        %v658 = vadd.f32 %v318, %v657
        %v659 = vpop.f32.mrb[0].mxu0
        %v660 = vpop.f32.mrb[0].mxu0
        %v661 = vadd.f32 %v318, %v660
        %v662 = vpop.f32.mrb[0].mxu0
        %663 = vmatprep.mubr.bf16.mxu0 %v559
        %664 = vmatmul.mubr.bf16.gmra.mrb[0].mxu0 %v426
        %v665 = vpop.f32.mrb[0].mxu0
        %v666 = vadd.f32 %v318, %v665
        %v667 = vpop.f32.mrb[0].mxu0
        %v668 = vpop.f32.mrb[0].mxu0
        %v669 = vadd.f32 %v318, %v668
        %v670 = vpop.f32.mrb[0].mxu0
        %671 = vmatprep.mubr.bf16.mxu0 %v562
        %672 = vmatmul.mubr.bf16.gmra.mrb[0].mxu0 %v428
        %v673 = vpop.f32.mrb[0].mxu0
        %v674 = vadd.f32 %v318, %v673
        %v675 = vpop.f32.mrb[0].mxu0
        %v676 = vpop.f32.mrb[0].mxu0
        %v677 = vadd.f32 %v318, %v676
        %v678 = vpop.f32.mrb[0].mxu0
        %679 = vmatprep.mubr.bf16.mxu0 %v565
        %680 = vmatmul.mubr.bf16.gmra.mrb[0].mxu0 %v430
        %v681 = vpop.f32.mrb[0].mxu0
        %v682 = vadd.f32 %v318, %v681
        %v683 = vpop.f32.mrb[0].mxu0
        %v684 = vpop.f32.mrb[0].mxu0
        %v685 = vadd.f32 %v318, %v684
        %v686 = vpop.f32.mrb[0].mxu0
        %687 = vmatprep.mubr.bf16.mxu0 %v568
        %688 = vmatmul.mubr.bf16.gmra.mrb[0].mxu0 %v432
        %v689 = vpop.f32.mrb[0].mxu0
        %v690 = vadd.f32 %v318, %v689
        %v691 = vpop.f32.mrb[0].mxu0
        %v692 = vpop.f32.mrb[0].mxu0
        %v693 = vadd.f32 %v318, %v692
        %v694 = vpop.f32.mrb[0].mxu0
        %695 = vmatprep.mubr.bf16.mxu0 %v571
        %696 = vmatmul.mubr.bf16.gmra.mrb[0].mxu0 %v434
        %v697 = vpop.f32.mrb[0].mxu0
        %v698 = vadd.f32 %v318, %v697
        %v699 = vpop.f32.mrb[0].mxu0
        %v700 = vpop.f32.mrb[0].mxu0
        %v701 = vadd.f32 %v318, %v700
        %v702 = vpop.f32.mrb[0].mxu0
        %703 = vmatprep.mubr.bf16.mxu0 %v574
        %704 = vmatmul.mubr.bf16.gmra.mrb[0].mxu0 %v436
        %v705 = vpop.f32.mrb[0].mxu0
        %v706 = vadd.f32 %v318, %v705
        %v707 = vpop.f32.mrb[0].mxu0
        %v708 = vpop.f32.mrb[0].mxu0
        %v709 = vadd.f32 %v318, %v708
        %v710 = vpop.f32.mrb[0].mxu0
        %711 = vmatprep.mubr.bf16.mxu0 %v577
        %712 = vmatmul.mubr.bf16.gmra.mrb[0].mxu0 %v438
        %v713 = vpop.f32.mrb[0].mxu0
        %v714 = vadd.f32 %v318, %v713
        %v715 = vpop.f32.mrb[0].mxu0
        %v716 = vpop.f32.mrb[0].mxu0
        %v717 = vadd.f32 %v318, %v716
        %v718 = vpop.f32.mrb[0].mxu0
        %719 = vmatprep.mubr.bf16.mxu0 %v580
        %720 = vmatmul.mubr.bf16.gmra.mrb[0].mxu0 %v440
        %v721 = vpop.f32.mrb[0].mxu0
        %v722 = vadd.f32 %v318, %v721
        %v723 = vpop.f32.mrb[0].mxu0
        %v724 = vpop.f32.mrb[0].mxu0
        %v725 = vadd.f32 %v318, %v724
        %v726 = vpop.f32.mrb[0].mxu0
        %727 = vmatprep.mubr.bf16.mxu0 %v583
        %728 = vmatmul.mubr.bf16.gmra.mrb[0].mxu0 %v442
        %v729 = vpop.f32.mrb[0].mxu0
        %v730 = vadd.f32 %v318, %v729
        %v731 = vpop.f32.mrb[0].mxu0
        %v732 = vpop.f32.mrb[0].mxu0
        %v733 = vadd.f32 %v318, %v732
        %v734 = vpop.f32.mrb[0].mxu0
        %735 = vmatprep.mubr.bf16.mxu0 %v586
        %736 = vmatmul.mubr.bf16.gmra.mrb[0].mxu0 %v444
        %v737 = vpop.f32.mrb[0].mxu0
        %v738 = vadd.f32 %v318, %v737
        %v739 = vpop.f32.mrb[0].mxu0
        %v740 = vpop.f32.mrb[0].mxu0
        %v741 = vadd.f32 %v318, %v740
        %v742 = vpop.f32.mrb[0].mxu0
        %743 = vmatprep.mubr.bf16.mxu0 %v589
        %744 = vmatmul.mubr.bf16.gmra.mrb[0].mxu0 %v446
        %v745 = vpop.f32.mrb[0].mxu0
        %v746 = vadd.f32 %v318, %v745
        %v747 = vpop.f32.mrb[0].mxu0
        %v748 = vpop.f32.mrb[0].mxu0
        %v749 = vadd.f32 %v318, %v748
        %v750 = vpop.f32.mrb[0].mxu0
        %751 = vdwg.mxu0
        %v752 = vld [vmem:[%s2] sm:$0xf]
        %v753 = vld [vmem:[%s2 + $0x4] sm:$0xf]
        %v754 = vld [vmem:[%s2 + $0x8] sm:$0xf]
        %v755 = vld [vmem:[%s2 + $0xc] sm:$0xf]
        %v756 = vld [vmem:[%s2 + $0x10] sm:$0xf]
        %v757 = vld [vmem:[%s2 + $0x14] sm:$0xf]
        %v758 = vld [vmem:[%s2 + $0x18] sm:$0xf]
        %v759 = vld [vmem:[%s2 + $0x1c] sm:$0xf]
        %v760 = vld [vmem:[%s2 + $0x20] sm:$0xf]
        %v761 = vld [vmem:[%s2 + $0x24] sm:$0xf]
        %v762 = vld [vmem:[%s2 + $0x28] sm:$0xf]
        %v763 = vld [vmem:[%s2 + $0x2c] sm:$0xf]
        %v764 = vld [vmem:[%s2 + $0x30] sm:$0xf]
        %v765 = vld [vmem:[%s2 + $0x34] sm:$0xf]
        %v766 = vld [vmem:[%s2 + $0x38] sm:$0xf]
        %v767 = vld [vmem:[%s2 + $0x3c] sm:$0xf]
        %v768 = vld [vmem:[%s2 + $0x40] sm:$0xf]
        %v769 = vld [vmem:[%s2 + $0x44] sm:$0xf]
        %v770 = vld [vmem:[%s2 + $0x48] sm:$0xf]
        %v771 = vld [vmem:[%s2 + $0x4c] sm:$0xf]
        %v772 = vld [vmem:[%s2 + $0x50] sm:$0xf]
        %v773 = vld [vmem:[%s2 + $0x54] sm:$0xf]
        %v774 = vld [vmem:[%s2 + $0x58] sm:$0xf]
        %v775 = vld [vmem:[%s2 + $0x5c] sm:$0xf]
        %v776 = vld [vmem:[%s2 + $0x60] sm:$0xf]
        %v777 = vld [vmem:[%s2 + $0x64] sm:$0xf]
        %v778 = vld [vmem:[%s4] sm:$0x1]
        %v780 = vlaneseq
        %v781 = vshrl.u32 %v780, 7
        %v782 = vsub.s32 0, %v781
        %v783 = vrot.slane %v778, %v782
        %v811 = vunpack.c.l.b16 %v752
        %v812 = vunpack.c.l.b16 %v753
        %v813 = vunpack.c.l.b16 %v754
        %v814 = vunpack.c.l.b16 %v755
        %v815 = vunpack.c.l.b16 %v756
        %v816 = vunpack.c.l.b16 %v757
        %v817 = vunpack.c.l.b16 %v758
        %v818 = vunpack.c.l.b16 %v759
        %v819 = vunpack.c.l.b16 %v760
        %v820 = vunpack.c.l.b16 %v761
        %v821 = vunpack.c.l.b16 %v762
        %v822 = vunpack.c.l.b16 %v763
        %v823 = vunpack.c.l.b16 %v764
        %v824 = vunpack.c.l.b16 %v765
        %v825 = vunpack.c.l.b16 %v766
        %v826 = vunpack.c.l.b16 %v767
        %v827 = vunpack.c.l.b16 %v768
        %v828 = vunpack.c.l.b16 %v769
        %v829 = vunpack.c.l.b16 %v770
        %v830 = vunpack.c.l.b16 %v771
        %v831 = vunpack.c.l.b16 %v772
        %v832 = vunpack.c.l.b16 %v773
        %v833 = vunpack.c.l.b16 %v774
        %v834 = vunpack.c.l.b16 %v775
        %v835 = vunpack.c.l.b16 %v776
        %v836 = vunpack.c.l.b16 %v777
        %v837 = vpack.c.b16 %v812, %v811
        %v838 = vpack.c.b16 %v814, %v813
        %v839 = vpack.c.b16 %v816, %v815
        %v840 = vpack.c.b16 %v818, %v817
        %v841 = vpack.c.b16 %v820, %v819
        %v842 = vpack.c.b16 %v822, %v821
        %v843 = vpack.c.b16 %v824, %v823
        %v844 = vpack.c.b16 %v826, %v825
        %v845 = vpack.c.b16 %v828, %v827
        %v846 = vpack.c.b16 %v830, %v829
        %v847 = vpack.c.b16 %v832, %v831
        %v848 = vpack.c.b16 %v834, %v833
        %v849 = vpack.c.b16 %v836, %v835
        %863 = vmatprep.subr.bf16.mxu0 0
        %864 = vmatpush1.bf16.msra.mxu0 %v837
        %865 = vmatprep.subr.bf16.mxu0 0
        %866 = vmatpush1.bf16.msra.mxu0 %v838
        %867 = vmatprep.subr.bf16.mxu0 0
        %868 = vmatpush1.bf16.msra.mxu0 %v839
        %869 = vmatprep.subr.bf16.mxu0 0
        %870 = vmatpush1.bf16.msra.mxu0 %v840
        %871 = vmatprep.subr.bf16.mxu0 0
        %872 = vmatpush1.bf16.msra.mxu0 %v841
        %873 = vmatprep.subr.bf16.mxu0 0
        %874 = vmatpush1.bf16.msra.mxu0 %v842
        %875 = vmatprep.subr.bf16.mxu0 0
        %876 = vmatpush1.bf16.msra.mxu0 %v843
        %877 = vmatprep.subr.bf16.mxu0 0
        %878 = vmatpush1.bf16.msra.mxu0 %v844
        %879 = vmatprep.subr.bf16.mxu0 0
        %880 = vmatpush1.bf16.msra.mxu0 %v845
        %881 = vmatprep.subr.bf16.mxu0 0
        %882 = vmatpush1.bf16.msra.mxu0 %v846
        %883 = vmatprep.subr.bf16.mxu0 0
        %884 = vmatpush1.bf16.msra.mxu0 %v847
        %885 = vmatprep.subr.bf16.mxu0 0
        %886 = vmatpush1.bf16.msra.mxu0 %v848
        %887 = vmatprep.subr.bf16.mxu0 0
        %888 = vmatpush1.bf16.msra.mxu0 %v849
        %889 = vmatprep.subr.bf16.mxu0 0
        %890 = vmatpush1.bf16.msra.mxu0 0
        %891 = vmatprep.subr.bf16.mxu0 0
        %892 = vmatpush1.bf16.msra.mxu0 0
        %893 = vmatprep.subr.bf16.mxu0 0
        %894 = vmatpush1.bf16.msra.mxu0 0
        %895 = vmatprep.mubr.bf16.mxu0 %v544
        %896 = vmatmul.mubr.bf16.gmra.mrb[0].mxu0 %v416
        %v897 = vpop.f32.mrb[0].mxu0
        %v898 = vadd.f32 %v783, %v897
        %v899 = vpop.f32.mrb[0].mxu0
        %v900 = vpop.f32.mrb[0].mxu0
        %v901 = vadd.f32 %v783, %v900
        %v902 = vpop.f32.mrb[0].mxu0
        %903 = vmatprep.mubr.bf16.mxu0 %v547
        %904 = vmatmul.mubr.bf16.gmra.mrb[0].mxu0 %v418
        %v905 = vpop.f32.mrb[0].mxu0
        %v906 = vadd.f32 %v783, %v905
        %v907 = vpop.f32.mrb[0].mxu0
        %v908 = vpop.f32.mrb[0].mxu0
        %v909 = vadd.f32 %v783, %v908
        %v910 = vpop.f32.mrb[0].mxu0
        %911 = vmatprep.mubr.bf16.mxu0 %v550
        %912 = vmatmul.mubr.bf16.gmra.mrb[0].mxu0 %v420
        %v913 = vpop.f32.mrb[0].mxu0
        %v914 = vadd.f32 %v783, %v913
        %v915 = vpop.f32.mrb[0].mxu0
        %v916 = vpop.f32.mrb[0].mxu0
        %v917 = vadd.f32 %v783, %v916
        %v918 = vpop.f32.mrb[0].mxu0
        %919 = vmatprep.mubr.bf16.mxu0 %v553
        %920 = vmatmul.mubr.bf16.gmra.mrb[0].mxu0 %v422
        %v921 = vpop.f32.mrb[0].mxu0
        %v922 = vadd.f32 %v783, %v921
        %v923 = vpop.f32.mrb[0].mxu0
        %v924 = vpop.f32.mrb[0].mxu0
        %v925 = vadd.f32 %v783, %v924
        %v926 = vpop.f32.mrb[0].mxu0
        %927 = vmatprep.mubr.bf16.mxu0 %v556
        %928 = vmatmul.mubr.bf16.gmra.mrb[0].mxu0 %v424
        %v929 = vpop.f32.mrb[0].mxu0
        %v930 = vadd.f32 %v783, %v929
        %v931 = vpop.f32.mrb[0].mxu0
        %v932 = vpop.f32.mrb[0].mxu0
        %v933 = vadd.f32 %v783, %v932
        %v934 = vpop.f32.mrb[0].mxu0
        %935 = vmatprep.mubr.bf16.mxu0 %v559
        %936 = vmatmul.mubr.bf16.gmra.mrb[0].mxu0 %v426
        %v937 = vpop.f32.mrb[0].mxu0
        %v938 = vadd.f32 %v783, %v937
        %v939 = vpop.f32.mrb[0].mxu0
        %v940 = vpop.f32.mrb[0].mxu0
        %v941 = vadd.f32 %v783, %v940
        %v942 = vpop.f32.mrb[0].mxu0
        %943 = vmatprep.mubr.bf16.mxu0 %v562
        %944 = vmatmul.mubr.bf16.gmra.mrb[0].mxu0 %v428
        %v945 = vpop.f32.mrb[0].mxu0
        %v946 = vadd.f32 %v783, %v945
        %v947 = vpop.f32.mrb[0].mxu0
        %v948 = vpop.f32.mrb[0].mxu0
        %v949 = vadd.f32 %v783, %v948
        %v950 = vpop.f32.mrb[0].mxu0
        %951 = vmatprep.mubr.bf16.mxu0 %v565
        %952 = vmatmul.mubr.bf16.gmra.mrb[0].mxu0 %v430
        %v953 = vpop.f32.mrb[0].mxu0
        %v954 = vadd.f32 %v783, %v953
        %v955 = vpop.f32.mrb[0].mxu0
        %v956 = vpop.f32.mrb[0].mxu0
        %v957 = vadd.f32 %v783, %v956
        %v958 = vpop.f32.mrb[0].mxu0
        %959 = vmatprep.mubr.bf16.mxu0 %v568
        %960 = vmatmul.mubr.bf16.gmra.mrb[0].mxu0 %v432
        %v961 = vpop.f32.mrb[0].mxu0
        %v962 = vadd.f32 %v783, %v961
        %v963 = vpop.f32.mrb[0].mxu0
        %v964 = vpop.f32.mrb[0].mxu0
        %v965 = vadd.f32 %v783, %v964
        %v966 = vpop.f32.mrb[0].mxu0
        %967 = vmatprep.mubr.bf16.mxu0 %v571
        %968 = vmatmul.mubr.bf16.gmra.mrb[0].mxu0 %v434
        %v969 = vpop.f32.mrb[0].mxu0
        %v970 = vadd.f32 %v783, %v969
        %v971 = vpop.f32.mrb[0].mxu0
        %v972 = vpop.f32.mrb[0].mxu0
        %v973 = vadd.f32 %v783, %v972
        %v974 = vpop.f32.mrb[0].mxu0
        %975 = vmatprep.mubr.bf16.mxu0 %v574
        %976 = vmatmul.mubr.bf16.gmra.mrb[0].mxu0 %v436
        %v977 = vpop.f32.mrb[0].mxu0
        %v978 = vadd.f32 %v783, %v977
        %v979 = vpop.f32.mrb[0].mxu0
        %v980 = vpop.f32.mrb[0].mxu0
        %v981 = vadd.f32 %v783, %v980
        %v982 = vpop.f32.mrb[0].mxu0
        %983 = vmatprep.mubr.bf16.mxu0 %v577
        %984 = vmatmul.mubr.bf16.gmra.mrb[0].mxu0 %v438
        %v985 = vpop.f32.mrb[0].mxu0
        %v986 = vadd.f32 %v783, %v985
        %v987 = vpop.f32.mrb[0].mxu0
        %v988 = vpop.f32.mrb[0].mxu0
        %v989 = vadd.f32 %v783, %v988
        %v990 = vpop.f32.mrb[0].mxu0
        %991 = vmatprep.mubr.bf16.mxu0 %v580
        %992 = vmatmul.mubr.bf16.gmra.mrb[0].mxu0 %v440
        %v993 = vpop.f32.mrb[0].mxu0
        %v994 = vadd.f32 %v783, %v993
        %v995 = vpop.f32.mrb[0].mxu0
        %v996 = vpop.f32.mrb[0].mxu0
        %v997 = vadd.f32 %v783, %v996
        %v998 = vpop.f32.mrb[0].mxu0
        %999 = vmatprep.mubr.bf16.mxu0 %v583
        %1000 = vmatmul.mubr.bf16.gmra.mrb[0].mxu0 %v442
        %v1001 = vpop.f32.mrb[0].mxu0
        %v1002 = vadd.f32 %v783, %v1001
        %v1003 = vpop.f32.mrb[0].mxu0
        %v1004 = vpop.f32.mrb[0].mxu0
        %v1005 = vadd.f32 %v783, %v1004
        %v1006 = vpop.f32.mrb[0].mxu0
        %1007 = vmatprep.mubr.bf16.mxu0 %v586
        %1008 = vmatmul.mubr.bf16.gmra.mrb[0].mxu0 %v444
        %v1009 = vpop.f32.mrb[0].mxu0
        %v1010 = vadd.f32 %v783, %v1009
        %v1011 = vpop.f32.mrb[0].mxu0
        %v1012 = vpop.f32.mrb[0].mxu0
        %v1013 = vadd.f32 %v783, %v1012
        %v1014 = vpop.f32.mrb[0].mxu0
        %1015 = vmatprep.mubr.bf16.mxu0 %v589
        %1016 = vmatmul.mubr.bf16.gmra.mrb[0].mxu0 %v446
        %v1017 = vpop.f32.mrb[0].mxu0
        %v1018 = vadd.f32 %v783, %v1017
        %v1019 = vpop.f32.mrb[0].mxu0
        %v1020 = vpop.f32.mrb[0].mxu0
        %v1021 = vadd.f32 %v783, %v1020
        %v1022 = vpop.f32.mrb[0].mxu0
        %1023 = vdwg.mxu0
        %v1024 = vmul.f32 %v626, %v898
        %v1025 = vmul.f32 %v629, %v901
        %v1026 = vmul.f32 %v634, %v906
        %v1027 = vmul.f32 %v637, %v909
        %v1028 = vmul.f32 %v642, %v914
        %v1029 = vmul.f32 %v645, %v917
        %v1030 = vmul.f32 %v650, %v922
        %v1031 = vmul.f32 %v653, %v925
        %v1032 = vmul.f32 %v658, %v930
        %v1033 = vmul.f32 %v661, %v933
        %v1034 = vmul.f32 %v666, %v938
        %v1035 = vmul.f32 %v669, %v941
        %v1036 = vmul.f32 %v674, %v946
        %v1037 = vmul.f32 %v677, %v949
        %v1038 = vmul.f32 %v682, %v954
        %v1039 = vmul.f32 %v685, %v957
        %v1040 = vmul.f32 %v690, %v962
        %v1041 = vmul.f32 %v693, %v965
        %v1042 = vmul.f32 %v698, %v970
        %v1043 = vmul.f32 %v701, %v973
        %v1044 = vmul.f32 %v706, %v978
        %v1045 = vmul.f32 %v709, %v981
        %v1046 = vmul.f32 %v714, %v986
        %v1047 = vmul.f32 %v717, %v989
        %v1048 = vmul.f32 %v722, %v994
        %v1049 = vmul.f32 %v725, %v997
        %v1050 = vmul.f32 %v730, %v1002
        %v1051 = vmul.f32 %v733, %v1005
        %v1052 = vmul.f32 %v738, %v1010
        %v1053 = vmul.f32 %v741, %v1013
        %v1054 = vmul.f32 %v746, %v1018
        %v1055 = vmul.f32 %v749, %v1021
        %vm1056 = vcmask 64512
        %1057 = vst.msk [vmem:[%s231] sm:$0xff] %vm1056, %v1024
        %1058 = vst.msk [vmem:[%s231 + $0x8] sm:$0xff] %vm1056, %v1025
        %1059 = vst.msk [vmem:[%s231 + $0x10] sm:$0xff] %vm1056, %v1026
        %1060 = vst.msk [vmem:[%s231 + $0x18] sm:$0xff] %vm1056, %v1027
        %1061 = vst.msk [vmem:[%s231 + $0x20] sm:$0xff] %vm1056, %v1028
        %1062 = vst.msk [vmem:[%s231 + $0x28] sm:$0xff] %vm1056, %v1029
        %1063 = vst.msk [vmem:[%s231 + $0x30] sm:$0xff] %vm1056, %v1030
        %1064 = vst.msk [vmem:[%s231 + $0x38] sm:$0xff] %vm1056, %v1031
        %1065 = vst.msk [vmem:[%s231 + $0x40] sm:$0xff] %vm1056, %v1032
        %1066 = vst.msk [vmem:[%s231 + $0x48] sm:$0xff] %vm1056, %v1033
        %1067 = vst.msk [vmem:[%s231 + $0x50] sm:$0xff] %vm1056, %v1034
        %1068 = vst.msk [vmem:[%s231 + $0x58] sm:$0xff] %vm1056, %v1035
        %1069 = vst.msk [vmem:[%s231 + $0x60] sm:$0xff] %vm1056, %v1036
        %1070 = vst.msk [vmem:[%s231 + $0x68] sm:$0xff] %vm1056, %v1037
        %1071 = vst.msk [vmem:[%s231 + $0x70] sm:$0xff] %vm1056, %v1038
        %1072 = vst.msk [vmem:[%s231 + $0x78] sm:$0xff] %vm1056, %v1039
        %1073 = vst.msk [vmem:[%s231 + $0x80] sm:$0xff] %vm1056, %v1040
        %1074 = vst.msk [vmem:[%s231 + $0x88] sm:$0xff] %vm1056, %v1041
        %1075 = vst.msk [vmem:[%s231 + $0x90] sm:$0xff] %vm1056, %v1042
        %1076 = vst.msk [vmem:[%s231 + $0x98] sm:$0xff] %vm1056, %v1043
        %1077 = vst.msk [vmem:[%s231 + $0xa0] sm:$0xff] %vm1056, %v1044
        %1078 = vst.msk [vmem:[%s231 + $0xa8] sm:$0xff] %vm1056, %v1045
        %1079 = vst.msk [vmem:[%s231 + $0xb0] sm:$0xff] %vm1056, %v1046
        %1080 = vst.msk [vmem:[%s231 + $0xb8] sm:$0xff] %vm1056, %v1047
        %1081 = vst.msk [vmem:[%s231 + $0xc0] sm:$0xff] %vm1056, %v1048
        %1082 = vst.msk [vmem:[%s231 + $0xc8] sm:$0xff] %vm1056, %v1049
        %1083 = vst.msk [vmem:[%s231 + $0xd0] sm:$0xff] %vm1056, %v1050
        %1084 = vst.msk [vmem:[%s231 + $0xd8] sm:$0xff] %vm1056, %v1051
        %1085 = vst.msk [vmem:[%s231 + $0xe0] sm:$0xff] %vm1056, %v1052
        %1086 = vst.msk [vmem:[%s231 + $0xe8] sm:$0xff] %vm1056, %v1053
        %1087 = vst.msk [vmem:[%s231 + $0xf0] sm:$0xff] %vm1056, %v1054
        %1088 = vst.msk [vmem:[%s231 + $0xf8] sm:$0xff] %vm1056, %v1055
        %s1089 = sand.u32 %s134, 1
        %s1090 = sand.u32 %s134, 1
        %s1091 = smul.addr %s1090, 256
        %s1092 = scalar_lea.vmem [#allocation2], %s1091
        // Predicated region
        $region41: #{scnn_forward.2} parent=39 // pred_check
          %p1093 = pneg %p144
        $region42: #{scnn_forward.2} parent=39 // pred_check_branch
          %1095 = sbr.rel (%p1093) target = $region44
        $region43: #{scnn_forward.2} parent=39 // pred_region
          %s1096 = smul.u32 32, %s16
          %s1097 = ssub.s32 48, %s1096
          %p1098 = scmp.lt.s32.totalorder %s1097, 32
          %s1099 = scalar_select %p1098, %s1097, 32
          %s1100 = smul.u32 128, %s1099
          %p1101 = scmp.ne.s32.totalorder 0, %s1100
          %s1102 = smul.addr %s1096, 8
          %s1103 = scalar_lea.vmem %s5, %s1102
          // Predicated region
          $region45: #{scnn_forward.2} parent=43 // pred_check
            %p1104 = pneg %p1101
          $region46: #{scnn_forward.2} parent=43 // pred_check_branch
            %1106 = sbr.rel (%p1104) target = $region48
          $region47: #{scnn_forward.2} parent=43 // pred_region
            // Predicated region
            $region49: #{scnn_forward.2} parent=47 // pred_check
              _
            $region50: #{scnn_forward.2} parent=47 // pred_check_branch
              %1108 = sbr.rel (0) target = $region52
            $region51: #{scnn_forward.2} parent=47 // pred_region
              // Predicated region
              $region71: #{scnn_forward.2} parent=51 // pred_check
                _
              $region72: #{scnn_forward.2} parent=51 // pred_check_branch
                %1219 = sbr.rel (0) target = $region74
              $region73: #{scnn_forward.2} parent=51 // pred_region
                %s1220 = sshrl.u32 %s1099, 5
                // While loop
                $region75: #{scnn_forward.2} parent=73 // loop_pre_header
                  _
                $region76: #{scnn_forward.2} parent=73 // loop_header
                  %s1222 = sphi 0, %s1224
                  %p1223 = scmp.ge.s32.totalorder %s1222, %s1220
                  %s1227 = sphi 0, %s1296
                  %s1228 = sphi %s1092, %s1299
                  %s1229 = sphi %s1103, %s1300
                $region77: #{scnn_forward.2} parent=73 // loop_header_branch
                  %1226 = sbr.rel (%p1223) target = $region81
                $region78: #{scnn_forward.2} parent=73 // loop_body
                  %v1230 = vld [vmem:[%s1228] sm:$0xff]
                  %1231 = vst [vmem:[%s1229] sm:$0xff] %v1230
                  %v1232 = vld [vmem:[%s1228 + $0x8] sm:$0xff]
                  %1233 = vst [vmem:[%s1229 + $0x8] sm:$0xff] %v1232
                  %v1234 = vld [vmem:[%s1228 + $0x10] sm:$0xff]
                  %1235 = vst [vmem:[%s1229 + $0x10] sm:$0xff] %v1234
                  %v1236 = vld [vmem:[%s1228 + $0x18] sm:$0xff]
                  %1237 = vst [vmem:[%s1229 + $0x18] sm:$0xff] %v1236
                  %v1238 = vld [vmem:[%s1228 + $0x20] sm:$0xff]
                  %1239 = vst [vmem:[%s1229 + $0x20] sm:$0xff] %v1238
                  %v1240 = vld [vmem:[%s1228 + $0x28] sm:$0xff]
                  %1241 = vst [vmem:[%s1229 + $0x28] sm:$0xff] %v1240
                  %v1242 = vld [vmem:[%s1228 + $0x30] sm:$0xff]
                  %1243 = vst [vmem:[%s1229 + $0x30] sm:$0xff] %v1242
                  %v1244 = vld [vmem:[%s1228 + $0x38] sm:$0xff]
                  %1245 = vst [vmem:[%s1229 + $0x38] sm:$0xff] %v1244
                  %v1246 = vld [vmem:[%s1228 + $0x40] sm:$0xff]
                  %1247 = vst [vmem:[%s1229 + $0x40] sm:$0xff] %v1246
                  %v1248 = vld [vmem:[%s1228 + $0x48] sm:$0xff]
                  %1249 = vst [vmem:[%s1229 + $0x48] sm:$0xff] %v1248
                  %v1250 = vld [vmem:[%s1228 + $0x50] sm:$0xff]
                  %1251 = vst [vmem:[%s1229 + $0x50] sm:$0xff] %v1250
                  %v1252 = vld [vmem:[%s1228 + $0x58] sm:$0xff]
                  %1253 = vst [vmem:[%s1229 + $0x58] sm:$0xff] %v1252
                  %v1254 = vld [vmem:[%s1228 + $0x60] sm:$0xff]
                  %1255 = vst [vmem:[%s1229 + $0x60] sm:$0xff] %v1254
                  %v1256 = vld [vmem:[%s1228 + $0x68] sm:$0xff]
                  %1257 = vst [vmem:[%s1229 + $0x68] sm:$0xff] %v1256
                  %v1258 = vld [vmem:[%s1228 + $0x70] sm:$0xff]
                  %1259 = vst [vmem:[%s1229 + $0x70] sm:$0xff] %v1258
                  %v1260 = vld [vmem:[%s1228 + $0x78] sm:$0xff]
                  %1261 = vst [vmem:[%s1229 + $0x78] sm:$0xff] %v1260
                  %v1262 = vld [vmem:[%s1228 + $0x80] sm:$0xff]
                  %1263 = vst [vmem:[%s1229 + $0x80] sm:$0xff] %v1262
                  %v1264 = vld [vmem:[%s1228 + $0x88] sm:$0xff]
                  %1265 = vst [vmem:[%s1229 + $0x88] sm:$0xff] %v1264
                  %v1266 = vld [vmem:[%s1228 + $0x90] sm:$0xff]
                  %1267 = vst [vmem:[%s1229 + $0x90] sm:$0xff] %v1266
                  %v1268 = vld [vmem:[%s1228 + $0x98] sm:$0xff]
                  %1269 = vst [vmem:[%s1229 + $0x98] sm:$0xff] %v1268
                  %v1270 = vld [vmem:[%s1228 + $0xa0] sm:$0xff]
                  %1271 = vst [vmem:[%s1229 + $0xa0] sm:$0xff] %v1270
                  %v1272 = vld [vmem:[%s1228 + $0xa8] sm:$0xff]
                  %1273 = vst [vmem:[%s1229 + $0xa8] sm:$0xff] %v1272
                  %v1274 = vld [vmem:[%s1228 + $0xb0] sm:$0xff]
                  %1275 = vst [vmem:[%s1229 + $0xb0] sm:$0xff] %v1274
                  %v1276 = vld [vmem:[%s1228 + $0xb8] sm:$0xff]
                  %1277 = vst [vmem:[%s1229 + $0xb8] sm:$0xff] %v1276
                  %v1278 = vld [vmem:[%s1228 + $0xc0] sm:$0xff]
                  %1279 = vst [vmem:[%s1229 + $0xc0] sm:$0xff] %v1278
                  %v1280 = vld [vmem:[%s1228 + $0xc8] sm:$0xff]
                  %1281 = vst [vmem:[%s1229 + $0xc8] sm:$0xff] %v1280
                  %v1282 = vld [vmem:[%s1228 + $0xd0] sm:$0xff]
                  %1283 = vst [vmem:[%s1229 + $0xd0] sm:$0xff] %v1282
                  %v1284 = vld [vmem:[%s1228 + $0xd8] sm:$0xff]
                  %1285 = vst [vmem:[%s1229 + $0xd8] sm:$0xff] %v1284
                  %v1286 = vld [vmem:[%s1228 + $0xe0] sm:$0xff]
                  %1287 = vst [vmem:[%s1229 + $0xe0] sm:$0xff] %v1286
                  %v1288 = vld [vmem:[%s1228 + $0xe8] sm:$0xff]
                  %1289 = vst [vmem:[%s1229 + $0xe8] sm:$0xff] %v1288
                  %v1290 = vld [vmem:[%s1228 + $0xf0] sm:$0xff]
                  %1291 = vst [vmem:[%s1229 + $0xf0] sm:$0xff] %v1290
                  %v1292 = vld [vmem:[%s1228 + $0xf8] sm:$0xff]
                  %1293 = vst [vmem:[%s1229 + $0xf8] sm:$0xff] %v1292
                  %s1294 = sadd.s32 1, %s1227
                  %p1295 = scmp.ge.s32.totalorder %s1294, %s1220
                  %s1296 = scalar_select %p1295, 0, %s1294
                  %s1297 = smul.u32 %s1296, 256
                  %s1298 = smul.u32 %s1296, 256
                  %s1299 = scalar_lea.vmem %s1092, %s1297 [#allocation2]
                  %s1300 = scalar_lea.vmem %s1103, %s1298
                $region79: #{scnn_forward.2} parent=73 // loop_footer
                  %s1224 = sadd.s32 %s1222, 1
                $region80: #{scnn_forward.2} parent=73 // loop_footer_branch
                  %1221 = sbr.rel target = $region76
                $region81: #{scnn_forward.2} parent=73 // loop_exit
                  _
                %s1301 = sshrl.u32 %s1099, 5
                %s1302 = sand.u32 %s1099, 31
                %s1303 = smul.u32 %s1301, 32
                %s1304 = smul.u32 8, %s1303
                %s1305 = scalar_lea.vmem %s1092, %s1304 [#allocation2]
                %s1306 = smul.u32 8, %s1303
                %s1307 = scalar_lea.vmem %s1103, %s1306
                // While loop
                $region82: #{scnn_forward.2} parent=73 // loop_pre_header
                  _
                $region83: #{scnn_forward.2} parent=73 // loop_header
                  %s1309 = sphi 0, %s1311
                  %p1310 = scmp.ge.s32.totalorder %s1309, %s1302
                  %s1314 = sphi 0, %s1321
                  %s1315 = sphi %s1305, %s1324
                  %s1316 = sphi %s1307, %s1325
                $region84: #{scnn_forward.2} parent=73 // loop_header_branch
                  %1313 = sbr.rel (%p1310) target = $region88
                $region85: #{scnn_forward.2} parent=73 // loop_body
                  %v1317 = vld [vmem:[%s1315] sm:$0xff]
                  %1318 = vst [vmem:[%s1316] sm:$0xff] %v1317
                  %s1319 = sadd.s32 1, %s1314
                  %p1320 = scmp.ge.s32.totalorder %s1319, %s1302
                  %s1321 = scalar_select %p1320, 0, %s1319
                  %s1322 = smul.u32 %s1321, 8
                  %s1323 = smul.u32 %s1321, 8
                  %s1324 = scalar_lea.vmem %s1305, %s1322 [#allocation2]
                  %s1325 = scalar_lea.vmem %s1307, %s1323
                $region86: #{scnn_forward.2} parent=73 // loop_footer
                  %s1311 = sadd.s32 %s1309, 1
                $region87: #{scnn_forward.2} parent=73 // loop_footer_branch
                  %1308 = sbr.rel target = $region83
                $region88: #{scnn_forward.2} parent=73 // loop_exit
                  _
              $region74: #{scnn_forward.2} parent=51 // pred_fallthru
                _
              // Predicated region
              $region89: #{scnn_forward.2} parent=51 // pred_check
                _
              $region90: #{scnn_forward.2} parent=51 // pred_check_branch
                %1327 = sbr.rel target = $region92
              $region91: #{scnn_forward.2} parent=51 // pred_region
                _
              $region92: #{scnn_forward.2} parent=51 // pred_fallthru
                _
            $region52: #{scnn_forward.2} parent=47 // pred_fallthru
              _
            // Predicated region
            $region53: #{scnn_forward.2} parent=47 // pred_check
              _
            $region54: #{scnn_forward.2} parent=47 // pred_check_branch
              %1110 = sbr.rel target = $region56
            $region55: #{scnn_forward.2} parent=47 // pred_region
              %s1112 = sshrl.u32 %s1099, 5
              // While loop
              $region57: #{scnn_forward.2} parent=55 // loop_pre_header
                _
              $region58: #{scnn_forward.2} parent=55 // loop_header
                %s1114 = sphi 0, %s1116
                %p1115 = scmp.ge.s32.totalorder %s1114, %s1112
                %s1119 = sphi 0, %s1188
                %s1120 = sphi %s1092, %s1191
                %s1121 = sphi %s1103, %s1192
              $region59: #{scnn_forward.2} parent=55 // loop_header_branch
                %1118 = sbr.rel (%p1115) target = $region63
              $region60: #{scnn_forward.2} parent=55 // loop_body
                %v1122 = vld [vmem:[%s1120] sm:$0xff]
                %1123 = vst [vmem:[%s1121] sm:$0xff] %v1122
                %v1124 = vld [vmem:[%s1120 + $0x8] sm:$0xff]
                %1125 = vst [vmem:[%s1121 + $0x8] sm:$0xff] %v1124
                %v1126 = vld [vmem:[%s1120 + $0x10] sm:$0xff]
                %1127 = vst [vmem:[%s1121 + $0x10] sm:$0xff] %v1126
                %v1128 = vld [vmem:[%s1120 + $0x18] sm:$0xff]
                %1129 = vst [vmem:[%s1121 + $0x18] sm:$0xff] %v1128
                %v1130 = vld [vmem:[%s1120 + $0x20] sm:$0xff]
                %1131 = vst [vmem:[%s1121 + $0x20] sm:$0xff] %v1130
                %v1132 = vld [vmem:[%s1120 + $0x28] sm:$0xff]
                %1133 = vst [vmem:[%s1121 + $0x28] sm:$0xff] %v1132
                %v1134 = vld [vmem:[%s1120 + $0x30] sm:$0xff]
                %1135 = vst [vmem:[%s1121 + $0x30] sm:$0xff] %v1134
                %v1136 = vld [vmem:[%s1120 + $0x38] sm:$0xff]
                %1137 = vst [vmem:[%s1121 + $0x38] sm:$0xff] %v1136
                %v1138 = vld [vmem:[%s1120 + $0x40] sm:$0xff]
                %1139 = vst [vmem:[%s1121 + $0x40] sm:$0xff] %v1138
                %v1140 = vld [vmem:[%s1120 + $0x48] sm:$0xff]
                %1141 = vst [vmem:[%s1121 + $0x48] sm:$0xff] %v1140
                %v1142 = vld [vmem:[%s1120 + $0x50] sm:$0xff]
                %1143 = vst [vmem:[%s1121 + $0x50] sm:$0xff] %v1142
                %v1144 = vld [vmem:[%s1120 + $0x58] sm:$0xff]
                %1145 = vst [vmem:[%s1121 + $0x58] sm:$0xff] %v1144
                %v1146 = vld [vmem:[%s1120 + $0x60] sm:$0xff]
                %1147 = vst [vmem:[%s1121 + $0x60] sm:$0xff] %v1146
                %v1148 = vld [vmem:[%s1120 + $0x68] sm:$0xff]
                %1149 = vst [vmem:[%s1121 + $0x68] sm:$0xff] %v1148
                %v1150 = vld [vmem:[%s1120 + $0x70] sm:$0xff]
                %1151 = vst [vmem:[%s1121 + $0x70] sm:$0xff] %v1150
                %v1152 = vld [vmem:[%s1120 + $0x78] sm:$0xff]
                %1153 = vst [vmem:[%s1121 + $0x78] sm:$0xff] %v1152
                %v1154 = vld [vmem:[%s1120 + $0x80] sm:$0xff]
                %1155 = vst [vmem:[%s1121 + $0x80] sm:$0xff] %v1154
                %v1156 = vld [vmem:[%s1120 + $0x88] sm:$0xff]
                %1157 = vst [vmem:[%s1121 + $0x88] sm:$0xff] %v1156
                %v1158 = vld [vmem:[%s1120 + $0x90] sm:$0xff]
                %1159 = vst [vmem:[%s1121 + $0x90] sm:$0xff] %v1158
                %v1160 = vld [vmem:[%s1120 + $0x98] sm:$0xff]
                %1161 = vst [vmem:[%s1121 + $0x98] sm:$0xff] %v1160
                %v1162 = vld [vmem:[%s1120 + $0xa0] sm:$0xff]
                %1163 = vst [vmem:[%s1121 + $0xa0] sm:$0xff] %v1162
                %v1164 = vld [vmem:[%s1120 + $0xa8] sm:$0xff]
                %1165 = vst [vmem:[%s1121 + $0xa8] sm:$0xff] %v1164
                %v1166 = vld [vmem:[%s1120 + $0xb0] sm:$0xff]
                %1167 = vst [vmem:[%s1121 + $0xb0] sm:$0xff] %v1166
                %v1168 = vld [vmem:[%s1120 + $0xb8] sm:$0xff]
                %1169 = vst [vmem:[%s1121 + $0xb8] sm:$0xff] %v1168
                %v1170 = vld [vmem:[%s1120 + $0xc0] sm:$0xff]
                %1171 = vst [vmem:[%s1121 + $0xc0] sm:$0xff] %v1170
                %v1172 = vld [vmem:[%s1120 + $0xc8] sm:$0xff]
                %1173 = vst [vmem:[%s1121 + $0xc8] sm:$0xff] %v1172
                %v1174 = vld [vmem:[%s1120 + $0xd0] sm:$0xff]
                %1175 = vst [vmem:[%s1121 + $0xd0] sm:$0xff] %v1174
                %v1176 = vld [vmem:[%s1120 + $0xd8] sm:$0xff]
                %1177 = vst [vmem:[%s1121 + $0xd8] sm:$0xff] %v1176
                %v1178 = vld [vmem:[%s1120 + $0xe0] sm:$0xff]
                %1179 = vst [vmem:[%s1121 + $0xe0] sm:$0xff] %v1178
                %v1180 = vld [vmem:[%s1120 + $0xe8] sm:$0xff]
                %1181 = vst [vmem:[%s1121 + $0xe8] sm:$0xff] %v1180
                %v1182 = vld [vmem:[%s1120 + $0xf0] sm:$0xff]
                %1183 = vst [vmem:[%s1121 + $0xf0] sm:$0xff] %v1182
                %v1184 = vld [vmem:[%s1120 + $0xf8] sm:$0xff]
                %1185 = vst [vmem:[%s1121 + $0xf8] sm:$0xff] %v1184
                %s1186 = sadd.s32 1, %s1119
                %p1187 = scmp.ge.s32.totalorder %s1186, %s1112
                %s1188 = scalar_select %p1187, 0, %s1186
                %s1189 = smul.u32 %s1188, 256
                %s1190 = smul.u32 %s1188, 256
                %s1191 = scalar_lea.vmem %s1092, %s1189 [#allocation2]
                %s1192 = scalar_lea.vmem %s1103, %s1190
              $region61: #{scnn_forward.2} parent=55 // loop_footer
                %s1116 = sadd.s32 %s1114, 1
              $region62: #{scnn_forward.2} parent=55 // loop_footer_branch
                %1113 = sbr.rel target = $region58
              $region63: #{scnn_forward.2} parent=55 // loop_exit
                _
              %s1193 = sshrl.u32 %s1099, 5
              %s1194 = sand.u32 %s1099, 31
              %s1195 = smul.u32 %s1193, 32
              %s1196 = smul.u32 8, %s1195
              %s1197 = scalar_lea.vmem %s1092, %s1196 [#allocation2]
              %s1198 = smul.u32 8, %s1195
              %s1199 = scalar_lea.vmem %s1103, %s1198
              // While loop
              $region64: #{scnn_forward.2} parent=55 // loop_pre_header
                _
              $region65: #{scnn_forward.2} parent=55 // loop_header
                %s1201 = sphi 0, %s1203
                %p1202 = scmp.ge.s32.totalorder %s1201, %s1194
                %s1206 = sphi 0, %s1213
                %s1207 = sphi %s1197, %s1216
                %s1208 = sphi %s1199, %s1217
              $region66: #{scnn_forward.2} parent=55 // loop_header_branch
                %1205 = sbr.rel (%p1202) target = $region70
              $region67: #{scnn_forward.2} parent=55 // loop_body
                %v1209 = vld [vmem:[%s1207] sm:$0xff]
                %1210 = vst [vmem:[%s1208] sm:$0xff] %v1209
                %s1211 = sadd.s32 1, %s1206
                %p1212 = scmp.ge.s32.totalorder %s1211, %s1194
                %s1213 = scalar_select %p1212, 0, %s1211
                %s1214 = smul.u32 %s1213, 8
                %s1215 = smul.u32 %s1213, 8
                %s1216 = scalar_lea.vmem %s1197, %s1214 [#allocation2]
                %s1217 = scalar_lea.vmem %s1199, %s1215
              $region68: #{scnn_forward.2} parent=55 // loop_footer
                %s1203 = sadd.s32 %s1201, 1
              $region69: #{scnn_forward.2} parent=55 // loop_footer_branch
                %1200 = sbr.rel target = $region65
              $region70: #{scnn_forward.2} parent=55 // loop_exit
                _
            $region56: #{scnn_forward.2} parent=47 // pred_fallthru
              _
          $region48: #{scnn_forward.2} parent=43 // pred_fallthru
            _
          %1328 = vnop
        $region44: #{scnn_forward.2} parent=39 // pred_fallthru
          _
      $region40: #{scnn_forward.2} parent=5 // pred_fallthru
        _
      %p1329 = scmp.le.s32.totalorder 2, %s11
      // Predicated region
      $region93: #{scnn_forward.2} parent=5 // pred_check
        %p1330 = pneg %p1329
      $region94: #{scnn_forward.2} parent=5 // pred_check_branch
        %1332 = sbr.rel (%p1330) target = $region96
      $region95: #{scnn_forward.2} parent=5 // pred_region
        %s1333 = ssub.s32 %s11, 2
        // Predicated region
        $region97: #{scnn_forward.2} parent=95 // pred_check
          %p1334 = pneg %p150
        $region98: #{scnn_forward.2} parent=95 // pred_check_branch
          %1336 = sbr.rel (%p1334) target = $region100
        $region99: #{scnn_forward.2} parent=95 // pred_region
          %s1337 = sand.u32 %s135, 1
          %s1338 = sand.u32 %s135, 1
          %s1339 = smul.addr %s1338, 256
          %s1340 = scalar_lea.vmem [#allocation2], %s1339
        $region100: #{scnn_forward.2} parent=95 // pred_fallthru
          _
      $region96: #{scnn_forward.2} parent=5 // pred_fallthru
        _
    $region6: #{scnn_forward.2} parent=1 // loop_footer
      %s15 = sadd.s32 1, %s11
    $region7: #{scnn_forward.2} parent=1 // loop_footer_branch
      %10 = sbr.rel target = $region3
    $region8: #{scnn_forward.2} parent=1 // loop_exit
      _

</llo_original>
